<compile_context>
chip_gen: v5e
topology: v5e:2x2
jax: 0.10.0
libtpu: 0.0.40
codegen_flags: <defaults>
</compile_context>

<pallas_src>
import functools
import math

import jax
import jax.numpy as jnp
import numpy as np
from jax.experimental import pallas as pl
from jax.experimental.pallas import tpu as pltpu  # noqa: F401  (TPU backend)

# ----- model config (TransformerClassifier defaults) ------------------------
D_MODEL = 88          # input_dim
D_PAD = 128           # lane-aligned padded width
NHEAD = 4
HEAD_DIM = D_MODEL // NHEAD     # 22
NUM_LAYERS = 2        # num_encoder_layers
DIM_FF = 256          # dim_feedforward
MAT_DIM = 2           # sequence length
BATCH = 8             # R = B*S = 16 rows per call (amortizes launch overhead)
FC1_DIM = 64
LN_EPS = 1e-5

PARAM_ORDER = ("mseg", "msegt", "lnmask", "gather", "sel",
               "wqkv", "bqkv", "wo", "bo", "g1", "b1", "w1", "bff1",
               "w2", "bff2", "g2", "b2", "fc1w", "fc1b", "fc2w", "fc2b")


# ---------------------------------------------------------------------------
# Fused Pallas kernel: full forward pass, everything resident in VMEM.
# ---------------------------------------------------------------------------
def fused_forward_kernel(x_ref,
                         mseg_ref, msegt_ref, lnmask_ref, gather_ref, sel_ref,
                         wqkv_ref, bqkv_ref, wo_ref, bo_ref,
                         g1_ref, b1_ref, w1_ref, bff1_ref,
                         w2_ref, bff2_ref, g2_ref, b2_ref,
                         fc1w_ref, fc1b_ref, fc2w_ref, fc2b_ref,
                         o_ref, *, seq, d_model, d_pad, num_layers):
    inv_d = 1.0 / d_model                       # LN statistics over the 88 real lanes

    mseg = mseg_ref[...]                        # (DP, H)  head segment matrix
    msegt = msegt_ref[...]                      # (H, DP)
    mask = lnmask_ref[...]                      # (1, DP)  ones on real lanes

    def layer_norm(t, g, b):
        mu = jnp.sum(t, axis=-1, keepdims=True) * inv_d
        d = (t - mu) * mask                     # keep padded lanes exactly 0
        var = jnp.sum(d * d, axis=-1, keepdims=True) * inv_d
        return d * jax.lax.rsqrt(var + LN_EPS) * g + b

    h = x_ref[...].astype(jnp.float32)          # (R, DP), padded lanes are 0

    for l in range(num_layers):
        # ---- fused QKV projection: one (R,128)@(128,384) MXU matmul --------
        # (1/sqrt(head_dim) scale is pre-folded into the Q block of wqkv/bqkv)
        qkv = jnp.dot(h, wqkv_ref[l], preferred_element_type=jnp.float32) + bqkv_ref[l]
        q = qkv[:, 0:d_pad]                     # 128-lane-aligned free slices
        k = qkv[:, d_pad:2 * d_pad]
        v = qkv[:, 2 * d_pad:3 * d_pad]

        # ---- attention (S=2, H=4): tiny MXU gathers + segment matmuls ------
        s_byj, v_byj = [], []
        for j in range(seq):
            g_j = gather_ref[j]                                        # (R, R) one-hot
            k_j = jnp.dot(g_j, k, preferred_element_type=jnp.float32)  # (R, DP)
            v_j = jnp.dot(g_j, v, preferred_element_type=jnp.float32)  # (R, DP)
            # per-head scores via segment matrix: (R,DP)@(DP,H) -> (R,H)
            s_byj.append(jnp.dot(q * k_j, mseg, preferred_element_type=jnp.float32))
            v_byj.append(v_j)

        # numerically-stable softmax over key positions, per (row, head)
        m = s_byj[0]
        for j in range(1, seq):
            m = jnp.maximum(m, s_byj[j])
        e_byj = [jnp.exp(s - m) for s in s_byj]
        den = e_byj[0]
        for j in range(1, seq):
            den = den + e_byj[j]
        inv = 1.0 / den                          # exact divide keeps 1e-4 tolerance

        # weighted sum of values; head probs broadcast to lanes via Mseg.T (MXU)
        ctx = None
        for j in range(seq):
            p_full = jnp.dot(e_byj[j] * inv, msegt,
                             preferred_element_type=jnp.float32)       # (R, DP)
            term = p_full * v_byj[j]
            ctx = term if ctx is None else ctx + term

        # single output projection: (R,128)@(128,128)
        attn = jnp.dot(ctx, wo_ref[l], preferred_element_type=jnp.float32) + bo_ref[l]

        # ---- residual + LayerNorm1 (dropout1 identity) ----------------------
        y = layer_norm(h + attn, g1_ref[l], b1_ref[l])

        # ---- feed-forward ----------------------------------------------------
        ff = jnp.dot(y, w1_ref[l], preferred_element_type=jnp.float32) + bff1_ref[l]
        ff = jnp.maximum(ff, 0.0)
        ff = jnp.dot(ff, w2_ref[l], preferred_element_type=jnp.float32) + bff2_ref[l]

        # ---- residual + LayerNorm2 (dropout2 identity) -----------------------
        h = layer_norm(y + ff, g2_ref[l], b2_ref[l])

    # ---- classifier head: flatten(1)+fc1 as per-position slabs + row select -
    #   z[b] = sum_s h[b*S+s, :88] @ fc1_w.T[s*88:(s+1)*88]  (all MXU, no concats)
    z = None
    for s in range(seq):
        zs = jnp.dot(h, fc1w_ref[s], preferred_element_type=jnp.float32)   # (R, 64)
        zb = jnp.dot(sel_ref[s], zs, preferred_element_type=jnp.float32)   # (B, 64)
        z = zb if z is None else z + zb
    z = jnp.maximum(z + fc1b_ref[...], 0.0)       # dropout identity, then ReLU
    out = jnp.dot(z, fc2w_ref[...], preferred_element_type=jnp.float32) + fc2b_ref[...]
    o_ref[...] = out.astype(o_ref.dtype)


# ---------------------------------------------------------------------------
# Wrapper: one grid-free pallas_call for the whole forward.
# ---------------------------------------------------------------------------
@jax.jit
def forward(x, packed):
    B, S, D = x.shape
    x2 = x.reshape(B * S, D)                      # rows ordered (b, s)
    xp = jnp.pad(x2, ((0, 0), (0, D_PAD - D)))    # lane-align once, outside the kernel
    kernel = functools.partial(
        fused_forward_kernel, seq=S, d_model=D, d_pad=D_PAD, num_layers=NUM_LAYERS)
    args = [packed[name] for name in PARAM_ORDER]
    return pl.pallas_call(
        kernel,
        out_shape=jax.ShapeDtypeStruct((B, 1), jnp.float32),
        cost_estimate=pl.CostEstimate(
            flops=10_000_000, transcendentals=512, bytes_accessed=1_300_000),
    )(xp, *args)


# ---------------------------------------------------------------------------
# deterministic parameter init (PyTorch-convention raw weights)
# ---------------------------------------------------------------------------
def init_params(key):
    def nrm(k, shape, scale=0.05):
        return scale * jax.random.normal(k, shape, dtype=jnp.float32)

    layers = []
    for _ in range(NUM_LAYERS):
        key, *ks = jax.random.split(key, 9)
        layers.append(dict(
            in_proj_w=nrm(ks[0], (3 * D_MODEL, D_MODEL)),
            in_proj_b=nrm(ks[1], (3 * D_MODEL,)),
            out_proj_w=nrm(ks[2], (D_MODEL, D_MODEL)),
            out_proj_b=nrm(ks[3], (D_MODEL,)),
            lin1_w=nrm(ks[4], (DIM_FF, D_MODEL)),
            lin1_b=nrm(ks[5], (DIM_FF,)),
            lin2_w=nrm(ks[6], (D_MODEL, DIM_FF)),
            lin2_b=nrm(ks[7], (D_MODEL,)),
            ln1_g=jnp.ones((D_MODEL,), jnp.float32),
            ln1_b=jnp.zeros((D_MODEL,), jnp.float32),
            ln2_g=jnp.ones((D_MODEL,), jnp.float32),
            ln2_b=jnp.zeros((D_MODEL,), jnp.float32),
        ))
    key, k1, k2, k3, k4 = jax.random.split(key, 5)
    head = dict(
        fc1_w=nrm(k1, (FC1_DIM, D_MODEL * MAT_DIM)),
        fc1_b=nrm(k2, (FC1_DIM,)),
        fc2_w=nrm(k3, (1, FC1_DIM)),
        fc2_b=nrm(k4, (1,)),
    )
    return layers, head


def pack_params(layer_raw, head_raw, batch):
    """Transpose/pad/stack PyTorch-layout weights ONCE into lane-aligned kernel slabs."""
    scale = 1.0 / math.sqrt(HEAD_DIM)
    D, DP, FF, S, H, Dh = D_MODEL, D_PAD, DIM_FF, MAT_DIM, NHEAD, HEAD_DIM
    R = batch * S

    def pad_vec(v):                               # (D,) -> (1, DP), zeros in padded lanes
        return jnp.pad(v[None, :], ((0, 0), (0, DP - D)))

    wqkv_l, bqkv_l, wo_l, bo_l = [], [], [], []
    g1_l, b1_l, g2_l, b2_l = [], [], [], []
    w1_l, bff1_l, w2_l, bff2_l = [], [], [], []
    for r in layer_raw:
        wt = r["in_proj_w"].T                     # (D, 3D)
        wq = wt[:, 0:D] * scale                   # fold attention scale into Q
        wk = wt[:, D:2 * D]
        wv = wt[:, 2 * D:3 * D]
        bq = r["in_proj_b"][0:D] * scale
        bk = r["in_proj_b"][D:2 * D]
        bv = r["in_proj_b"][2 * D:3 * D]

        wqkv = jnp.zeros((DP, 3 * DP), jnp.float32)
        wqkv = wqkv.at[:D, 0:D].set(wq)
        wqkv = wqkv.at[:D, DP:DP + D].set(wk)
        wqkv = wqkv.at[:D, 2 * DP:2 * DP + D].set(wv)
        bqkv = jnp.zeros((1, 3 * DP), jnp.float32)
        bqkv = bqkv.at[0, 0:D].set(bq)
        bqkv = bqkv.at[0, DP:DP + D].set(bk)
        bqkv = bqkv.at[0, 2 * DP:2 * DP + D].set(bv)

        wo = jnp.zeros((DP, DP), jnp.float32).at[:D, :D].set(r["out_proj_w"].T)
        w1 = jnp.zeros((DP, FF), jnp.float32).at[:D, :].set(r["lin1_w"].T)
        w2 = jnp.zeros((FF, DP), jnp.float32).at[:, :D].set(r["lin2_w"].T)

        wqkv_l.append(wqkv); bqkv_l.append(bqkv)
        wo_l.append(wo); bo_l.append(pad_vec(r["out_proj_b"]))
        g1_l.append(pad_vec(r["ln1_g"])); b1_l.append(pad_vec(r["ln1_b"]))
        g2_l.append(pad_vec(r["ln2_g"])); b2_l.append(pad_vec(r["ln2_b"]))
        w1_l.append(w1); bff1_l.append(r["lin1_b"][None, :])
        w2_l.append(w2); bff2_l.append(pad_vec(r["lin2_b"]))

    # classifier head: per-sequence-position fc1 slabs (DP, 64)
    fc1t = head_raw["fc1_w"].T                    # (S*D, 64)
    fc1w = jnp.stack(
        [jnp.zeros((DP, FC1_DIM), jnp.float32).at[:D, :].set(fc1t[s * D:(s + 1) * D, :])
         for s in range(S)], axis=0)              # (S, DP, 64)

    # precomputed constant matrices (head segments, gathers, selections, LN mask)
    mseg = np.zeros((DP, H), np.float32)
    for hh in range(H):
        mseg[hh * Dh:(hh + 1) * Dh, hh] = 1.0
    lnmask = np.zeros((1, DP), np.float32)
    lnmask[0, :D] = 1.0
    gather = np.zeros((S, R, R), np.float32)      # gather[j] @ k == key at pos j per batch
    for j in range(S):
        for rr in range(R):
            gather[j, rr, (rr // S) * S + j] = 1.0
    sel = np.zeros((S, batch, R), np.float32)     # sel[s] picks row (b, s) for output b
    for s in range(S):
        for b in range(batch):
            sel[s, b, b * S + s] = 1.0

    return dict(
        mseg=jnp.asarray(mseg), msegt=jnp.asarray(mseg.T), lnmask=jnp.asarray(lnmask),
        gather=jnp.asarray(gather), sel=jnp.asarray(sel),
        wqkv=jnp.stack(wqkv_l), bqkv=jnp.stack(bqkv_l),
        wo=jnp.stack(wo_l), bo=jnp.stack(bo_l),
        g1=jnp.stack(g1_l), b1=jnp.stack(b1_l),
        w1=jnp.stack(w1_l), bff1=jnp.stack(bff1_l),
        w2=jnp.stack(w2_l), bff2=jnp.stack(bff2_l),
        g2=jnp.stack(g2_l), b2=jnp.stack(b2_l),
        fc1w=fc1w, fc1b=head_raw["fc1_b"][None, :],
        fc2w=head_raw["fc2_w"].T, fc2b=head_raw["fc2_b"][None, :],
    )


# ---------------------------------------------------------------------------
# pure-JAX reference (mirrors PyTorch post-norm TransformerEncoderLayer, eval)
# ---------------------------------------------------------------------------
def ref_forward(x, layer_raw, head_raw):
    def ln(t, g, b):
        mu = t.mean(-1, keepdims=True)
        var = ((t - mu) ** 2).mean(-1, keepdims=True)
        return (t - mu) / jnp.sqrt(var + LN_EPS) * g + b

    B, S, D = x.shape
    H, Dh = NHEAD, HEAD_DIM
    h = x
    for raw in layer_raw:
        qkv = h @ raw["in_proj_w"].T + raw["in_proj_b"]
        q, k, v = jnp.split(qkv, 3, axis=-1)
        sh = lambda t: t.reshape(B, S, H, Dh).transpose(0, 2, 1, 3)
        q, k, v = sh(q), sh(k), sh(v)
        s = jnp.einsum('bhqd,bhkd->bhqk', q, k) / math.sqrt(Dh)
        p = jax.nn.softmax(s, axis=-1)
        o = jnp.einsum('bhqk,bhkd->bhqd', p, v).transpose(0, 2, 1, 3).reshape(B, S, D)
        attn = o @ raw["out_proj_w"].T + raw["out_proj_b"]
        y = ln(h + attn, raw["ln1_g"], raw["ln1_b"])
        ff = jnp.maximum(y @ raw["lin1_w"].T + raw["lin1_b"], 0.0) @ raw["lin2_w"].T + raw["lin2_b"]
        h = ln(y + ff, raw["ln2_g"], raw["ln2_b"])
    h = h.reshape(B, -1)
    h = jnp.maximum(h @ head_raw["fc1_w"].T + head_raw["fc1_b"], 0.0)
    return h @ head_raw["fc2_w"].T + head_raw["fc2_b"]


if __name__ == "__main__":
    key = jax.random.PRNGKey(0)
    key, xk = jax.random.split(key)
    # input: (batch, mat_dim, input_dim) == (B, S, D) — same tensor the PyTorch
    # module receives before its internal permute(1, 0, 2).
    x = jax.random.normal(xk, (BATCH, MAT_DIM, D_MODEL), dtype=jnp.float32)
    layer_raw, head_raw = init_params(key)

    packed = pack_params(layer_raw, head_raw, BATCH)   # packing/padding runs exactly once
    out = jax.block_until_ready(forward(x, packed))
    assert out.shape == (BATCH, 1), out.shape

    ref = ref_forward(x, layer_raw, head_raw)
    if not bool(jnp.allclose(out, ref, atol=1e-4, rtol=1e-4)):
        raise AssertionError(f"mismatch: pallas={out}, ref={ref}")

    # TODO(synk): train-mode dropout (stochastic masking) intentionally omitted;
    # eval-mode dropout is an exact identity.
    print("KERNEL_OK")
</pallas_src>

<mosaic_0001>
module attributes {stable_mosaic.version = 11 : i64} {
  func.func @fused_forward_kernel(%arg0: memref<16x128xf32, #tpu.memory_space<vmem>>, %arg1: memref<128x4xf32, #tpu.memory_space<vmem>>, %arg2: memref<4x128xf32, #tpu.memory_space<vmem>>, %arg3: memref<1x128xf32, #tpu.memory_space<vmem>>, %arg4: memref<2x16x16xf32, #tpu.memory_space<vmem>>, %arg5: memref<2x8x16xf32, #tpu.memory_space<vmem>>, %arg6: memref<2x128x384xf32, #tpu.memory_space<vmem>>, %arg7: memref<2x1x384xf32, #tpu.memory_space<vmem>>, %arg8: memref<2x128x128xf32, #tpu.memory_space<vmem>>, %arg9: memref<2x1x128xf32, #tpu.memory_space<vmem>>, %arg10: memref<2x1x128xf32, #tpu.memory_space<vmem>>, %arg11: memref<2x1x128xf32, #tpu.memory_space<vmem>>, %arg12: memref<2x128x256xf32, #tpu.memory_space<vmem>>, %arg13: memref<2x1x256xf32, #tpu.memory_space<vmem>>, %arg14: memref<2x256x128xf32, #tpu.memory_space<vmem>>, %arg15: memref<2x1x128xf32, #tpu.memory_space<vmem>>, %arg16: memref<2x1x128xf32, #tpu.memory_space<vmem>>, %arg17: memref<2x1x128xf32, #tpu.memory_space<vmem>>, %arg18: memref<2x128x64xf32, #tpu.memory_space<vmem>>, %arg19: memref<1x64xf32, #tpu.memory_space<vmem>>, %arg20: memref<64x1xf32, #tpu.memory_space<vmem>>, %arg21: memref<1x1xf32, #tpu.memory_space<vmem>>, %arg22: memref<8x1xf32, #tpu.memory_space<vmem>>) attributes {dimension_semantics = [], scalar_prefetch = 0 : i64, scratch_operands = 0 : i64, tpu.core_type = #tpu.core_type<tc>} {
    %c0 = arith.constant 0 : index
    %c0_0 = arith.constant 0 : index
    %0 = vector.load %arg1[%c0, %c0_0] : memref<128x4xf32, #tpu.memory_space<vmem>>, vector<128x4xf32>
    %c0_1 = arith.constant 0 : index
    %c0_2 = arith.constant 0 : index
    %1 = vector.load %arg2[%c0_1, %c0_2] : memref<4x128xf32, #tpu.memory_space<vmem>>, vector<4x128xf32>
    %c0_3 = arith.constant 0 : index
    %c0_4 = arith.constant 0 : index
    %2 = vector.load %arg3[%c0_3, %c0_4] : memref<1x128xf32, #tpu.memory_space<vmem>>, vector<1x128xf32>
    %c0_5 = arith.constant 0 : index
    %c0_6 = arith.constant 0 : index
    %3 = vector.load %arg0[%c0_5, %c0_6] : memref<16x128xf32, #tpu.memory_space<vmem>>, vector<16x128xf32>
    %c0_7 = arith.constant 0 : index
    %c0_8 = arith.constant 0 : index
    %c0_9 = arith.constant 0 : index
    %4 = vector.load %arg6[%c0_7, %c0_8, %c0_9] : memref<2x128x384xf32, #tpu.memory_space<vmem>>, vector<1x128x384xf32>
    %5 = vector.shape_cast %4 : vector<1x128x384xf32> to vector<128x384xf32>
    %cst = arith.constant dense<0.000000e+00> : vector<16x384xf32>
    %6 = tpu.matmul %3, %5, %cst {dimension_numbers = #tpu.dot_dimension_numbers<[1], [0], [0], [1], [0, 0, 1, 1], [], []>} : vector<16x128xf32>, vector<128x384xf32>, vector<16x384xf32> -> vector<16x384xf32>
    %c0_10 = arith.constant 0 : index
    %c0_11 = arith.constant 0 : index
    %c0_12 = arith.constant 0 : index
    %7 = vector.load %arg7[%c0_10, %c0_11, %c0_12] : memref<2x1x384xf32, #tpu.memory_space<vmem>>, vector<1x1x384xf32>
    %8 = vector.shape_cast %7 : vector<1x1x384xf32> to vector<1x384xf32>
    %9 = vector.broadcast %8 : vector<1x384xf32> to vector<16x384xf32>
    %10 = arith.addf %6, %9 : vector<16x384xf32>
    %11 = vector.extract_strided_slice %10 {offsets = [0, 0], sizes = [16, 128], strides = [1, 1]} : vector<16x384xf32> to vector<16x128xf32>
    %12 = vector.extract_strided_slice %10 {offsets = [0, 128], sizes = [16, 128], strides = [1, 1]} : vector<16x384xf32> to vector<16x128xf32>
    %13 = vector.extract_strided_slice %10 {offsets = [0, 256], sizes = [16, 128], strides = [1, 1]} : vector<16x384xf32> to vector<16x128xf32>
    %c0_13 = arith.constant 0 : index
    %c0_14 = arith.constant 0 : index
    %c0_15 = arith.constant 0 : index
    %14 = vector.load %arg4[%c0_13, %c0_14, %c0_15] : memref<2x16x16xf32, #tpu.memory_space<vmem>>, vector<1x16x16xf32>
    %15 = vector.shape_cast %14 : vector<1x16x16xf32> to vector<16x16xf32>
    %cst_16 = arith.constant dense<0.000000e+00> : vector<16x128xf32>
    %16 = tpu.matmul %15, %12, %cst_16 {dimension_numbers = #tpu.dot_dimension_numbers<[1], [0], [0], [1], [0, 0, 1, 1], [], []>} : vector<16x16xf32>, vector<16x128xf32>, vector<16x128xf32> -> vector<16x128xf32>
    %cst_17 = arith.constant dense<0.000000e+00> : vector<16x128xf32>
    %17 = tpu.matmul %15, %13, %cst_17 {dimension_numbers = #tpu.dot_dimension_numbers<[1], [0], [0], [1], [0, 0, 1, 1], [], []>} : vector<16x16xf32>, vector<16x128xf32>, vector<16x128xf32> -> vector<16x128xf32>
    %18 = arith.mulf %11, %16 : vector<16x128xf32>
    %cst_18 = arith.constant dense<0.000000e+00> : vector<16x4xf32>
    %19 = tpu.matmul %18, %0, %cst_18 {dimension_numbers = #tpu.dot_dimension_numbers<[1], [0], [0], [1], [0, 0, 1, 1], [], []>} : vector<16x128xf32>, vector<128x4xf32>, vector<16x4xf32> -> vector<16x4xf32>
    %c1 = arith.constant 1 : index
    %c0_19 = arith.constant 0 : index
    %c0_20 = arith.constant 0 : index
    %20 = vector.load %arg4[%c1, %c0_19, %c0_20] : memref<2x16x16xf32, #tpu.memory_space<vmem>>, vector<1x16x16xf32>
    %21 = vector.shape_cast %20 : vector<1x16x16xf32> to vector<16x16xf32>
    %cst_21 = arith.constant dense<0.000000e+00> : vector<16x128xf32>
    %22 = tpu.matmul %21, %12, %cst_21 {dimension_numbers = #tpu.dot_dimension_numbers<[1], [0], [0], [1], [0, 0, 1, 1], [], []>} : vector<16x16xf32>, vector<16x128xf32>, vector<16x128xf32> -> vector<16x128xf32>
    %cst_22 = arith.constant dense<0.000000e+00> : vector<16x128xf32>
    %23 = tpu.matmul %21, %13, %cst_22 {dimension_numbers = #tpu.dot_dimension_numbers<[1], [0], [0], [1], [0, 0, 1, 1], [], []>} : vector<16x16xf32>, vector<16x128xf32>, vector<16x128xf32> -> vector<16x128xf32>
    %24 = arith.mulf %11, %22 : vector<16x128xf32>
    %cst_23 = arith.constant dense<0.000000e+00> : vector<16x4xf32>
    %25 = tpu.matmul %24, %0, %cst_23 {dimension_numbers = #tpu.dot_dimension_numbers<[1], [0], [0], [1], [0, 0, 1, 1], [], []>} : vector<16x128xf32>, vector<128x4xf32>, vector<16x4xf32> -> vector<16x4xf32>
    %26 = arith.maximumf %19, %25 : vector<16x4xf32>
    %27 = arith.subf %19, %26 : vector<16x4xf32>
    %28 = math.exp %27 : vector<16x4xf32>
    %29 = arith.subf %25, %26 : vector<16x4xf32>
    %30 = math.exp %29 : vector<16x4xf32>
    %31 = arith.addf %28, %30 : vector<16x4xf32>
    %cst_24 = arith.constant 1.000000e+00 : f32
    %32 = vector.broadcast %cst_24 : f32 to vector<16x4xf32>
    %33 = arith.divf %32, %31 : vector<16x4xf32>
    %34 = arith.mulf %28, %33 : vector<16x4xf32>
    %cst_25 = arith.constant dense<0.000000e+00> : vector<16x128xf32>
    %35 = tpu.matmul %34, %1, %cst_25 {dimension_numbers = #tpu.dot_dimension_numbers<[1], [0], [0], [1], [0, 0, 1, 1], [], []>} : vector<16x4xf32>, vector<4x128xf32>, vector<16x128xf32> -> vector<16x128xf32>
    %36 = arith.mulf %35, %17 : vector<16x128xf32>
    %37 = arith.mulf %30, %33 : vector<16x4xf32>
    %cst_26 = arith.constant dense<0.000000e+00> : vector<16x128xf32>
    %38 = tpu.matmul %37, %1, %cst_26 {dimension_numbers = #tpu.dot_dimension_numbers<[1], [0], [0], [1], [0, 0, 1, 1], [], []>} : vector<16x4xf32>, vector<4x128xf32>, vector<16x128xf32> -> vector<16x128xf32>
    %39 = arith.mulf %38, %23 : vector<16x128xf32>
    %40 = arith.addf %36, %39 : vector<16x128xf32>
    %c0_27 = arith.constant 0 : index
    %c0_28 = arith.constant 0 : index
    %c0_29 = arith.constant 0 : index
    %41 = vector.load %arg8[%c0_27, %c0_28, %c0_29] : memref<2x128x128xf32, #tpu.memory_space<vmem>>, vector<1x128x128xf32>
    %42 = vector.shape_cast %41 : vector<1x128x128xf32> to vector<128x128xf32>
    %cst_30 = arith.constant dense<0.000000e+00> : vector<16x128xf32>
    %43 = tpu.matmul %40, %42, %cst_30 {dimension_numbers = #tpu.dot_dimension_numbers<[1], [0], [0], [1], [0, 0, 1, 1], [], []>} : vector<16x128xf32>, vector<128x128xf32>, vector<16x128xf32> -> vector<16x128xf32>
    %c0_31 = arith.constant 0 : index
    %c0_32 = arith.constant 0 : index
    %c0_33 = arith.constant 0 : index
    %44 = vector.load %arg9[%c0_31, %c0_32, %c0_33] : memref<2x1x128xf32, #tpu.memory_space<vmem>>, vector<1x1x128xf32>
    %45 = vector.shape_cast %44 : vector<1x1x128xf32> to vector<1x128xf32>
    %46 = vector.broadcast %45 : vector<1x128xf32> to vector<16x128xf32>
    %47 = arith.addf %43, %46 : vector<16x128xf32>
    %48 = arith.addf %3, %47 : vector<16x128xf32>
    %c0_34 = arith.constant 0 : index
    %c0_35 = arith.constant 0 : index
    %c0_36 = arith.constant 0 : index
    %49 = vector.load %arg10[%c0_34, %c0_35, %c0_36] : memref<2x1x128xf32, #tpu.memory_space<vmem>>, vector<1x1x128xf32>
    %50 = vector.shape_cast %49 : vector<1x1x128xf32> to vector<1x128xf32>
    %c0_37 = arith.constant 0 : index
    %c0_38 = arith.constant 0 : index
    %c0_39 = arith.constant 0 : index
    %51 = vector.load %arg11[%c0_37, %c0_38, %c0_39] : memref<2x1x128xf32, #tpu.memory_space<vmem>>, vector<1x1x128xf32>
    %52 = vector.shape_cast %51 : vector<1x1x128xf32> to vector<1x128xf32>
    %cst_40 = arith.constant dense<0.000000e+00> : vector<16xf32>
    %53 = vector.multi_reduction <add>, %48, %cst_40 [1] : vector<16x128xf32> to vector<16xf32>
    %54 = vector.shape_cast %53 : vector<16xf32> to vector<16x1xf32>
    %cst_41 = arith.constant 0.0113636367 : f32
    %55 = vector.broadcast %cst_41 : f32 to vector<16x1xf32>
    %56 = arith.mulf %54, %55 : vector<16x1xf32>
    %57 = vector.broadcast %56 : vector<16x1xf32> to vector<16x128xf32>
    %58 = arith.subf %48, %57 : vector<16x128xf32>
    %59 = vector.broadcast %2 : vector<1x128xf32> to vector<16x128xf32>
    %60 = arith.mulf %58, %59 : vector<16x128xf32>
    %61 = arith.mulf %60, %60 : vector<16x128xf32>
    %cst_42 = arith.constant dense<0.000000e+00> : vector<16xf32>
    %62 = vector.multi_reduction <add>, %61, %cst_42 [1] : vector<16x128xf32> to vector<16xf32>
    %63 = vector.shape_cast %62 : vector<16xf32> to vector<16x1xf32>
    %cst_43 = arith.constant 0.0113636367 : f32
    %64 = vector.broadcast %cst_43 : f32 to vector<16x1xf32>
    %65 = arith.mulf %63, %64 : vector<16x1xf32>
    %cst_44 = arith.constant 9.99999974E-6 : f32
    %66 = vector.broadcast %cst_44 : f32 to vector<16x1xf32>
    %67 = arith.addf %65, %66 : vector<16x1xf32>
    %68 = math.rsqrt %67 : vector<16x1xf32>
    %69 = vector.broadcast %68 : vector<16x1xf32> to vector<16x128xf32>
    %70 = arith.mulf %60, %69 : vector<16x128xf32>
    %71 = vector.broadcast %50 : vector<1x128xf32> to vector<16x128xf32>
    %72 = arith.mulf %70, %71 : vector<16x128xf32>
    %73 = vector.broadcast %52 : vector<1x128xf32> to vector<16x128xf32>
    %74 = arith.addf %72, %73 : vector<16x128xf32>
    %c0_45 = arith.constant 0 : index
    %c0_46 = arith.constant 0 : index
    %c0_47 = arith.constant 0 : index
    %75 = vector.load %arg12[%c0_45, %c0_46, %c0_47] : memref<2x128x256xf32, #tpu.memory_space<vmem>>, vector<1x128x256xf32>
    %76 = vector.shape_cast %75 : vector<1x128x256xf32> to vector<128x256xf32>
    %cst_48 = arith.constant dense<0.000000e+00> : vector<16x256xf32>
    %77 = tpu.matmul %74, %76, %cst_48 {dimension_numbers = #tpu.dot_dimension_numbers<[1], [0], [0], [1], [0, 0, 1, 1], [], []>} : vector<16x128xf32>, vector<128x256xf32>, vector<16x256xf32> -> vector<16x256xf32>
    %c0_49 = arith.constant 0 : index
    %c0_50 = arith.constant 0 : index
    %c0_51 = arith.constant 0 : index
    %78 = vector.load %arg13[%c0_49, %c0_50, %c0_51] : memref<2x1x256xf32, #tpu.memory_space<vmem>>, vector<1x1x256xf32>
    %79 = vector.shape_cast %78 : vector<1x1x256xf32> to vector<1x256xf32>
    %80 = vector.broadcast %79 : vector<1x256xf32> to vector<16x256xf32>
    %81 = arith.addf %77, %80 : vector<16x256xf32>
    %cst_52 = arith.constant 0.000000e+00 : f32
    %82 = vector.broadcast %cst_52 : f32 to vector<16x256xf32>
    %83 = arith.maximumf %81, %82 : vector<16x256xf32>
    %c0_53 = arith.constant 0 : index
    %c0_54 = arith.constant 0 : index
    %c0_55 = arith.constant 0 : index
    %84 = vector.load %arg14[%c0_53, %c0_54, %c0_55] : memref<2x256x128xf32, #tpu.memory_space<vmem>>, vector<1x256x128xf32>
    %85 = vector.shape_cast %84 : vector<1x256x128xf32> to vector<256x128xf32>
    %cst_56 = arith.constant dense<0.000000e+00> : vector<16x128xf32>
    %86 = tpu.matmul %83, %85, %cst_56 {dimension_numbers = #tpu.dot_dimension_numbers<[1], [0], [0], [1], [0, 0, 1, 1], [], []>} : vector<16x256xf32>, vector<256x128xf32>, vector<16x128xf32> -> vector<16x128xf32>
    %c0_57 = arith.constant 0 : index
    %c0_58 = arith.constant 0 : index
    %c0_59 = arith.constant 0 : index
    %87 = vector.load %arg15[%c0_57, %c0_58, %c0_59] : memref<2x1x128xf32, #tpu.memory_space<vmem>>, vector<1x1x128xf32>
    %88 = vector.shape_cast %87 : vector<1x1x128xf32> to vector<1x128xf32>
    %89 = vector.broadcast %88 : vector<1x128xf32> to vector<16x128xf32>
    %90 = arith.addf %86, %89 : vector<16x128xf32>
    %91 = arith.addf %74, %90 : vector<16x128xf32>
    %c0_60 = arith.constant 0 : index
    %c0_61 = arith.constant 0 : index
    %c0_62 = arith.constant 0 : index
    %92 = vector.load %arg16[%c0_60, %c0_61, %c0_62] : memref<2x1x128xf32, #tpu.memory_space<vmem>>, vector<1x1x128xf32>
    %93 = vector.shape_cast %92 : vector<1x1x128xf32> to vector<1x128xf32>
    %c0_63 = arith.constant 0 : index
    %c0_64 = arith.constant 0 : index
    %c0_65 = arith.constant 0 : index
    %94 = vector.load %arg17[%c0_63, %c0_64, %c0_65] : memref<2x1x128xf32, #tpu.memory_space<vmem>>, vector<1x1x128xf32>
    %95 = vector.shape_cast %94 : vector<1x1x128xf32> to vector<1x128xf32>
    %cst_66 = arith.constant dense<0.000000e+00> : vector<16xf32>
    %96 = vector.multi_reduction <add>, %91, %cst_66 [1] : vector<16x128xf32> to vector<16xf32>
    %97 = vector.shape_cast %96 : vector<16xf32> to vector<16x1xf32>
    %cst_67 = arith.constant 0.0113636367 : f32
    %98 = vector.broadcast %cst_67 : f32 to vector<16x1xf32>
    %99 = arith.mulf %97, %98 : vector<16x1xf32>
    %100 = vector.broadcast %99 : vector<16x1xf32> to vector<16x128xf32>
    %101 = arith.subf %91, %100 : vector<16x128xf32>
    %102 = vector.broadcast %2 : vector<1x128xf32> to vector<16x128xf32>
    %103 = arith.mulf %101, %102 : vector<16x128xf32>
    %104 = arith.mulf %103, %103 : vector<16x128xf32>
    %cst_68 = arith.constant dense<0.000000e+00> : vector<16xf32>
    %105 = vector.multi_reduction <add>, %104, %cst_68 [1] : vector<16x128xf32> to vector<16xf32>
    %106 = vector.shape_cast %105 : vector<16xf32> to vector<16x1xf32>
    %cst_69 = arith.constant 0.0113636367 : f32
    %107 = vector.broadcast %cst_69 : f32 to vector<16x1xf32>
    %108 = arith.mulf %106, %107 : vector<16x1xf32>
    %cst_70 = arith.constant 9.99999974E-6 : f32
    %109 = vector.broadcast %cst_70 : f32 to vector<16x1xf32>
    %110 = arith.addf %108, %109 : vector<16x1xf32>
    %111 = math.rsqrt %110 : vector<16x1xf32>
    %112 = vector.broadcast %111 : vector<16x1xf32> to vector<16x128xf32>
    %113 = arith.mulf %103, %112 : vector<16x128xf32>
    %114 = vector.broadcast %93 : vector<1x128xf32> to vector<16x128xf32>
    %115 = arith.mulf %113, %114 : vector<16x128xf32>
    %116 = vector.broadcast %95 : vector<1x128xf32> to vector<16x128xf32>
    %117 = arith.addf %115, %116 : vector<16x128xf32>
    %c1_71 = arith.constant 1 : index
    %c0_72 = arith.constant 0 : index
    %c0_73 = arith.constant 0 : index
    %118 = vector.load %arg6[%c1_71, %c0_72, %c0_73] : memref<2x128x384xf32, #tpu.memory_space<vmem>>, vector<1x128x384xf32>
    %119 = vector.shape_cast %118 : vector<1x128x384xf32> to vector<128x384xf32>
    %cst_74 = arith.constant dense<0.000000e+00> : vector<16x384xf32>
    %120 = tpu.matmul %117, %119, %cst_74 {dimension_numbers = #tpu.dot_dimension_numbers<[1], [0], [0], [1], [0, 0, 1, 1], [], []>} : vector<16x128xf32>, vector<128x384xf32>, vector<16x384xf32> -> vector<16x384xf32>
    %c1_75 = arith.constant 1 : index
    %c0_76 = arith.constant 0 : index
    %c0_77 = arith.constant 0 : index
    %121 = vector.load %arg7[%c1_75, %c0_76, %c0_77] : memref<2x1x384xf32, #tpu.memory_space<vmem>>, vector<1x1x384xf32>
    %122 = vector.shape_cast %121 : vector<1x1x384xf32> to vector<1x384xf32>
    %123 = vector.broadcast %122 : vector<1x384xf32> to vector<16x384xf32>
    %124 = arith.addf %120, %123 : vector<16x384xf32>
    %125 = vector.extract_strided_slice %124 {offsets = [0, 0], sizes = [16, 128], strides = [1, 1]} : vector<16x384xf32> to vector<16x128xf32>
    %126 = vector.extract_strided_slice %124 {offsets = [0, 128], sizes = [16, 128], strides = [1, 1]} : vector<16x384xf32> to vector<16x128xf32>
    %127 = vector.extract_strided_slice %124 {offsets = [0, 256], sizes = [16, 128], strides = [1, 1]} : vector<16x384xf32> to vector<16x128xf32>
    %c0_78 = arith.constant 0 : index
    %c0_79 = arith.constant 0 : index
    %c0_80 = arith.constant 0 : index
    %128 = vector.load %arg4[%c0_78, %c0_79, %c0_80] : memref<2x16x16xf32, #tpu.memory_space<vmem>>, vector<1x16x16xf32>
    %129 = vector.shape_cast %128 : vector<1x16x16xf32> to vector<16x16xf32>
    %cst_81 = arith.constant dense<0.000000e+00> : vector<16x128xf32>
    %130 = tpu.matmul %129, %126, %cst_81 {dimension_numbers = #tpu.dot_dimension_numbers<[1], [0], [0], [1], [0, 0, 1, 1], [], []>} : vector<16x16xf32>, vector<16x128xf32>, vector<16x128xf32> -> vector<16x128xf32>
    %cst_82 = arith.constant dense<0.000000e+00> : vector<16x128xf32>
    %131 = tpu.matmul %129, %127, %cst_82 {dimension_numbers = #tpu.dot_dimension_numbers<[1], [0], [0], [1], [0, 0, 1, 1], [], []>} : vector<16x16xf32>, vector<16x128xf32>, vector<16x128xf32> -> vector<16x128xf32>
    %132 = arith.mulf %125, %130 : vector<16x128xf32>
    %cst_83 = arith.constant dense<0.000000e+00> : vector<16x4xf32>
    %133 = tpu.matmul %132, %0, %cst_83 {dimension_numbers = #tpu.dot_dimension_numbers<[1], [0], [0], [1], [0, 0, 1, 1], [], []>} : vector<16x128xf32>, vector<128x4xf32>, vector<16x4xf32> -> vector<16x4xf32>
    %c1_84 = arith.constant 1 : index
    %c0_85 = arith.constant 0 : index
    %c0_86 = arith.constant 0 : index
    %134 = vector.load %arg4[%c1_84, %c0_85, %c0_86] : memref<2x16x16xf32, #tpu.memory_space<vmem>>, vector<1x16x16xf32>
    %135 = vector.shape_cast %134 : vector<1x16x16xf32> to vector<16x16xf32>
    %cst_87 = arith.constant dense<0.000000e+00> : vector<16x128xf32>
    %136 = tpu.matmul %135, %126, %cst_87 {dimension_numbers = #tpu.dot_dimension_numbers<[1], [0], [0], [1], [0, 0, 1, 1], [], []>} : vector<16x16xf32>, vector<16x128xf32>, vector<16x128xf32> -> vector<16x128xf32>
    %cst_88 = arith.constant dense<0.000000e+00> : vector<16x128xf32>
    %137 = tpu.matmul %135, %127, %cst_88 {dimension_numbers = #tpu.dot_dimension_numbers<[1], [0], [0], [1], [0, 0, 1, 1], [], []>} : vector<16x16xf32>, vector<16x128xf32>, vector<16x128xf32> -> vector<16x128xf32>
    %138 = arith.mulf %125, %136 : vector<16x128xf32>
    %cst_89 = arith.constant dense<0.000000e+00> : vector<16x4xf32>
    %139 = tpu.matmul %138, %0, %cst_89 {dimension_numbers = #tpu.dot_dimension_numbers<[1], [0], [0], [1], [0, 0, 1, 1], [], []>} : vector<16x128xf32>, vector<128x4xf32>, vector<16x4xf32> -> vector<16x4xf32>
    %140 = arith.maximumf %133, %139 : vector<16x4xf32>
    %141 = arith.subf %133, %140 : vector<16x4xf32>
    %142 = math.exp %141 : vector<16x4xf32>
    %143 = arith.subf %139, %140 : vector<16x4xf32>
    %144 = math.exp %143 : vector<16x4xf32>
    %145 = arith.addf %142, %144 : vector<16x4xf32>
    %cst_90 = arith.constant 1.000000e+00 : f32
    %146 = vector.broadcast %cst_90 : f32 to vector<16x4xf32>
    %147 = arith.divf %146, %145 : vector<16x4xf32>
    %148 = arith.mulf %142, %147 : vector<16x4xf32>
    %cst_91 = arith.constant dense<0.000000e+00> : vector<16x128xf32>
    %149 = tpu.matmul %148, %1, %cst_91 {dimension_numbers = #tpu.dot_dimension_numbers<[1], [0], [0], [1], [0, 0, 1, 1], [], []>} : vector<16x4xf32>, vector<4x128xf32>, vector<16x128xf32> -> vector<16x128xf32>
    %150 = arith.mulf %149, %131 : vector<16x128xf32>
    %151 = arith.mulf %144, %147 : vector<16x4xf32>
    %cst_92 = arith.constant dense<0.000000e+00> : vector<16x128xf32>
    %152 = tpu.matmul %151, %1, %cst_92 {dimension_numbers = #tpu.dot_dimension_numbers<[1], [0], [0], [1], [0, 0, 1, 1], [], []>} : vector<16x4xf32>, vector<4x128xf32>, vector<16x128xf32> -> vector<16x128xf32>
    %153 = arith.mulf %152, %137 : vector<16x128xf32>
    %154 = arith.addf %150, %153 : vector<16x128xf32>
    %c1_93 = arith.constant 1 : index
    %c0_94 = arith.constant 0 : index
    %c0_95 = arith.constant 0 : index
    %155 = vector.load %arg8[%c1_93, %c0_94, %c0_95] : memref<2x128x128xf32, #tpu.memory_space<vmem>>, vector<1x128x128xf32>
    %156 = vector.shape_cast %155 : vector<1x128x128xf32> to vector<128x128xf32>
    %cst_96 = arith.constant dense<0.000000e+00> : vector<16x128xf32>
    %157 = tpu.matmul %154, %156, %cst_96 {dimension_numbers = #tpu.dot_dimension_numbers<[1], [0], [0], [1], [0, 0, 1, 1], [], []>} : vector<16x128xf32>, vector<128x128xf32>, vector<16x128xf32> -> vector<16x128xf32>
    %c1_97 = arith.constant 1 : index
    %c0_98 = arith.constant 0 : index
    %c0_99 = arith.constant 0 : index
    %158 = vector.load %arg9[%c1_97, %c0_98, %c0_99] : memref<2x1x128xf32, #tpu.memory_space<vmem>>, vector<1x1x128xf32>
    %159 = vector.shape_cast %158 : vector<1x1x128xf32> to vector<1x128xf32>
    %160 = vector.broadcast %159 : vector<1x128xf32> to vector<16x128xf32>
    %161 = arith.addf %157, %160 : vector<16x128xf32>
    %162 = arith.addf %117, %161 : vector<16x128xf32>
    %c1_100 = arith.constant 1 : index
    %c0_101 = arith.constant 0 : index
    %c0_102 = arith.constant 0 : index
    %163 = vector.load %arg10[%c1_100, %c0_101, %c0_102] : memref<2x1x128xf32, #tpu.memory_space<vmem>>, vector<1x1x128xf32>
    %164 = vector.shape_cast %163 : vector<1x1x128xf32> to vector<1x128xf32>
    %c1_103 = arith.constant 1 : index
    %c0_104 = arith.constant 0 : index
    %c0_105 = arith.constant 0 : index
    %165 = vector.load %arg11[%c1_103, %c0_104, %c0_105] : memref<2x1x128xf32, #tpu.memory_space<vmem>>, vector<1x1x128xf32>
    %166 = vector.shape_cast %165 : vector<1x1x128xf32> to vector<1x128xf32>
    %cst_106 = arith.constant dense<0.000000e+00> : vector<16xf32>
    %167 = vector.multi_reduction <add>, %162, %cst_106 [1] : vector<16x128xf32> to vector<16xf32>
    %168 = vector.shape_cast %167 : vector<16xf32> to vector<16x1xf32>
    %cst_107 = arith.constant 0.0113636367 : f32
    %169 = vector.broadcast %cst_107 : f32 to vector<16x1xf32>
    %170 = arith.mulf %168, %169 : vector<16x1xf32>
    %171 = vector.broadcast %170 : vector<16x1xf32> to vector<16x128xf32>
    %172 = arith.subf %162, %171 : vector<16x128xf32>
    %173 = vector.broadcast %2 : vector<1x128xf32> to vector<16x128xf32>
    %174 = arith.mulf %172, %173 : vector<16x128xf32>
    %175 = arith.mulf %174, %174 : vector<16x128xf32>
    %cst_108 = arith.constant dense<0.000000e+00> : vector<16xf32>
    %176 = vector.multi_reduction <add>, %175, %cst_108 [1] : vector<16x128xf32> to vector<16xf32>
    %177 = vector.shape_cast %176 : vector<16xf32> to vector<16x1xf32>
    %cst_109 = arith.constant 0.0113636367 : f32
    %178 = vector.broadcast %cst_109 : f32 to vector<16x1xf32>
    %179 = arith.mulf %177, %178 : vector<16x1xf32>
    %cst_110 = arith.constant 9.99999974E-6 : f32
    %180 = vector.broadcast %cst_110 : f32 to vector<16x1xf32>
    %181 = arith.addf %179, %180 : vector<16x1xf32>
    %182 = math.rsqrt %181 : vector<16x1xf32>
    %183 = vector.broadcast %182 : vector<16x1xf32> to vector<16x128xf32>
    %184 = arith.mulf %174, %183 : vector<16x128xf32>
    %185 = vector.broadcast %164 : vector<1x128xf32> to vector<16x128xf32>
    %186 = arith.mulf %184, %185 : vector<16x128xf32>
    %187 = vector.broadcast %166 : vector<1x128xf32> to vector<16x128xf32>
    %188 = arith.addf %186, %187 : vector<16x128xf32>
    %c1_111 = arith.constant 1 : index
    %c0_112 = arith.constant 0 : index
    %c0_113 = arith.constant 0 : index
    %189 = vector.load %arg12[%c1_111, %c0_112, %c0_113] : memref<2x128x256xf32, #tpu.memory_space<vmem>>, vector<1x128x256xf32>
    %190 = vector.shape_cast %189 : vector<1x128x256xf32> to vector<128x256xf32>
    %cst_114 = arith.constant dense<0.000000e+00> : vector<16x256xf32>
    %191 = tpu.matmul %188, %190, %cst_114 {dimension_numbers = #tpu.dot_dimension_numbers<[1], [0], [0], [1], [0, 0, 1, 1], [], []>} : vector<16x128xf32>, vector<128x256xf32>, vector<16x256xf32> -> vector<16x256xf32>
    %c1_115 = arith.constant 1 : index
    %c0_116 = arith.constant 0 : index
    %c0_117 = arith.constant 0 : index
    %192 = vector.load %arg13[%c1_115, %c0_116, %c0_117] : memref<2x1x256xf32, #tpu.memory_space<vmem>>, vector<1x1x256xf32>
    %193 = vector.shape_cast %192 : vector<1x1x256xf32> to vector<1x256xf32>
    %194 = vector.broadcast %193 : vector<1x256xf32> to vector<16x256xf32>
    %195 = arith.addf %191, %194 : vector<16x256xf32>
    %cst_118 = arith.constant 0.000000e+00 : f32
    %196 = vector.broadcast %cst_118 : f32 to vector<16x256xf32>
    %197 = arith.maximumf %195, %196 : vector<16x256xf32>
    %c1_119 = arith.constant 1 : index
    %c0_120 = arith.constant 0 : index
    %c0_121 = arith.constant 0 : index
    %198 = vector.load %arg14[%c1_119, %c0_120, %c0_121] : memref<2x256x128xf32, #tpu.memory_space<vmem>>, vector<1x256x128xf32>
    %199 = vector.shape_cast %198 : vector<1x256x128xf32> to vector<256x128xf32>
    %cst_122 = arith.constant dense<0.000000e+00> : vector<16x128xf32>
    %200 = tpu.matmul %197, %199, %cst_122 {dimension_numbers = #tpu.dot_dimension_numbers<[1], [0], [0], [1], [0, 0, 1, 1], [], []>} : vector<16x256xf32>, vector<256x128xf32>, vector<16x128xf32> -> vector<16x128xf32>
    %c1_123 = arith.constant 1 : index
    %c0_124 = arith.constant 0 : index
    %c0_125 = arith.constant 0 : index
    %201 = vector.load %arg15[%c1_123, %c0_124, %c0_125] : memref<2x1x128xf32, #tpu.memory_space<vmem>>, vector<1x1x128xf32>
    %202 = vector.shape_cast %201 : vector<1x1x128xf32> to vector<1x128xf32>
    %203 = vector.broadcast %202 : vector<1x128xf32> to vector<16x128xf32>
    %204 = arith.addf %200, %203 : vector<16x128xf32>
    %205 = arith.addf %188, %204 : vector<16x128xf32>
    %c1_126 = arith.constant 1 : index
    %c0_127 = arith.constant 0 : index
    %c0_128 = arith.constant 0 : index
    %206 = vector.load %arg16[%c1_126, %c0_127, %c0_128] : memref<2x1x128xf32, #tpu.memory_space<vmem>>, vector<1x1x128xf32>
    %207 = vector.shape_cast %206 : vector<1x1x128xf32> to vector<1x128xf32>
    %c1_129 = arith.constant 1 : index
    %c0_130 = arith.constant 0 : index
    %c0_131 = arith.constant 0 : index
    %208 = vector.load %arg17[%c1_129, %c0_130, %c0_131] : memref<2x1x128xf32, #tpu.memory_space<vmem>>, vector<1x1x128xf32>
    %209 = vector.shape_cast %208 : vector<1x1x128xf32> to vector<1x128xf32>
    %cst_132 = arith.constant dense<0.000000e+00> : vector<16xf32>
    %210 = vector.multi_reduction <add>, %205, %cst_132 [1] : vector<16x128xf32> to vector<16xf32>
    %211 = vector.shape_cast %210 : vector<16xf32> to vector<16x1xf32>
    %cst_133 = arith.constant 0.0113636367 : f32
    %212 = vector.broadcast %cst_133 : f32 to vector<16x1xf32>
    %213 = arith.mulf %211, %212 : vector<16x1xf32>
    %214 = vector.broadcast %213 : vector<16x1xf32> to vector<16x128xf32>
    %215 = arith.subf %205, %214 : vector<16x128xf32>
    %216 = vector.broadcast %2 : vector<1x128xf32> to vector<16x128xf32>
    %217 = arith.mulf %215, %216 : vector<16x128xf32>
    %218 = arith.mulf %217, %217 : vector<16x128xf32>
    %cst_134 = arith.constant dense<0.000000e+00> : vector<16xf32>
    %219 = vector.multi_reduction <add>, %218, %cst_134 [1] : vector<16x128xf32> to vector<16xf32>
    %220 = vector.shape_cast %219 : vector<16xf32> to vector<16x1xf32>
    %cst_135 = arith.constant 0.0113636367 : f32
    %221 = vector.broadcast %cst_135 : f32 to vector<16x1xf32>
    %222 = arith.mulf %220, %221 : vector<16x1xf32>
    %cst_136 = arith.constant 9.99999974E-6 : f32
    %223 = vector.broadcast %cst_136 : f32 to vector<16x1xf32>
    %224 = arith.addf %222, %223 : vector<16x1xf32>
    %225 = math.rsqrt %224 : vector<16x1xf32>
    %226 = vector.broadcast %225 : vector<16x1xf32> to vector<16x128xf32>
    %227 = arith.mulf %217, %226 : vector<16x128xf32>
    %228 = vector.broadcast %207 : vector<1x128xf32> to vector<16x128xf32>
    %229 = arith.mulf %227, %228 : vector<16x128xf32>
    %230 = vector.broadcast %209 : vector<1x128xf32> to vector<16x128xf32>
    %231 = arith.addf %229, %230 : vector<16x128xf32>
    %c0_137 = arith.constant 0 : index
    %c0_138 = arith.constant 0 : index
    %c0_139 = arith.constant 0 : index
    %232 = vector.load %arg18[%c0_137, %c0_138, %c0_139] : memref<2x128x64xf32, #tpu.memory_space<vmem>>, vector<1x128x64xf32>
    %233 = vector.shape_cast %232 : vector<1x128x64xf32> to vector<128x64xf32>
    %cst_140 = arith.constant dense<0.000000e+00> : vector<16x64xf32>
    %234 = tpu.matmul %231, %233, %cst_140 {dimension_numbers = #tpu.dot_dimension_numbers<[1], [0], [0], [1], [0, 0, 1, 1], [], []>} : vector<16x128xf32>, vector<128x64xf32>, vector<16x64xf32> -> vector<16x64xf32>
    %c0_141 = arith.constant 0 : index
    %c0_142 = arith.constant 0 : index
    %c0_143 = arith.constant 0 : index
    %235 = vector.load %arg5[%c0_141, %c0_142, %c0_143] : memref<2x8x16xf32, #tpu.memory_space<vmem>>, vector<1x8x16xf32>
    %236 = vector.shape_cast %235 : vector<1x8x16xf32> to vector<8x16xf32>
    %cst_144 = arith.constant dense<0.000000e+00> : vector<8x64xf32>
    %237 = tpu.matmul %236, %234, %cst_144 {dimension_numbers = #tpu.dot_dimension_numbers<[1], [0], [0], [1], [0, 0, 1, 1], [], []>} : vector<8x16xf32>, vector<16x64xf32>, vector<8x64xf32> -> vector<8x64xf32>
    %c1_145 = arith.constant 1 : index
    %c0_146 = arith.constant 0 : index
    %c0_147 = arith.constant 0 : index
    %238 = vector.load %arg18[%c1_145, %c0_146, %c0_147] : memref<2x128x64xf32, #tpu.memory_space<vmem>>, vector<1x128x64xf32>
    %239 = vector.shape_cast %238 : vector<1x128x64xf32> to vector<128x64xf32>
    %cst_148 = arith.constant dense<0.000000e+00> : vector<16x64xf32>
    %240 = tpu.matmul %231, %239, %cst_148 {dimension_numbers = #tpu.dot_dimension_numbers<[1], [0], [0], [1], [0, 0, 1, 1], [], []>} : vector<16x128xf32>, vector<128x64xf32>, vector<16x64xf32> -> vector<16x64xf32>
    %c1_149 = arith.constant 1 : index
    %c0_150 = arith.constant 0 : index
    %c0_151 = arith.constant 0 : index
    %241 = vector.load %arg5[%c1_149, %c0_150, %c0_151] : memref<2x8x16xf32, #tpu.memory_space<vmem>>, vector<1x8x16xf32>
    %242 = vector.shape_cast %241 : vector<1x8x16xf32> to vector<8x16xf32>
    %cst_152 = arith.constant dense<0.000000e+00> : vector<8x64xf32>
    %243 = tpu.matmul %242, %240, %cst_152 {dimension_numbers = #tpu.dot_dimension_numbers<[1], [0], [0], [1], [0, 0, 1, 1], [], []>} : vector<8x16xf32>, vector<16x64xf32>, vector<8x64xf32> -> vector<8x64xf32>
    %244 = arith.addf %237, %243 : vector<8x64xf32>
    %c0_153 = arith.constant 0 : index
    %c0_154 = arith.constant 0 : index
    %245 = vector.load %arg19[%c0_153, %c0_154] : memref<1x64xf32, #tpu.memory_space<vmem>>, vector<1x64xf32>
    %246 = vector.broadcast %245 : vector<1x64xf32> to vector<8x64xf32>
    %247 = arith.addf %244, %246 : vector<8x64xf32>
    %cst_155 = arith.constant 0.000000e+00 : f32
    %248 = vector.broadcast %cst_155 : f32 to vector<8x64xf32>
    %249 = arith.maximumf %247, %248 : vector<8x64xf32>
    %c0_156 = arith.constant 0 : index
    %c0_157 = arith.constant 0 : index
    %250 = vector.load %arg20[%c0_156, %c0_157] : memref<64x1xf32, #tpu.memory_space<vmem>>, vector<64x1xf32>
    %cst_158 = arith.constant dense<0.000000e+00> : vector<8x1xf32>
    %251 = tpu.matmul %249, %250, %cst_158 {dimension_numbers = #tpu.dot_dimension_numbers<[1], [0], [0], [1], [0, 0, 1, 1], [], []>} : vector<8x64xf32>, vector<64x1xf32>, vector<8x1xf32> -> vector<8x1xf32>
    %c0_159 = arith.constant 0 : index
    %c0_160 = arith.constant 0 : index
    %252 = vector.load %arg21[%c0_159, %c0_160] : memref<1x1xf32, #tpu.memory_space<vmem>>, vector<1x1xf32>
    %253 = vector.broadcast %252 : vector<1x1xf32> to vector<8x1xf32>
    %254 = arith.addf %251, %253 : vector<8x1xf32>
    %c0_161 = arith.constant 0 : index
    %c0_162 = arith.constant 0 : index
    %255 = vector.load %arg22[%c0_161, %c0_162] : memref<8x1xf32, #tpu.memory_space<vmem>>, vector<8x1xf32>
    tpu.vector_store %arg22[%c0_161, %c0_162], %254 {strides = array<i32>} : memref<8x1xf32, #tpu.memory_space<vmem>>, vector<8x1xf32>,
    return
  }
}

</mosaic_0001>

<llo_original>
// kernel: forward.1
$region0: #{forward.1}
  #allocation0 [shape = 'u32[]', space=smem, size = 0x4, offset = 0x4, fixed_abs, tag = 'smem constant byte address 0x4 - core index']
  #allocation1 [shape = 'u32[72,128]{1,0:T(1,128)}', space=vmem, size = 0x9000, scoped, tag = 'internal scratch']
  #allocation2 [shape = 'f32[1,1]{1,0:T(1,128)S(1)}', space=vmem, size = 0x200, scoped, tag = 'scoped memory for forward.1']
  %s0 = inlined_call_operand.vmem [shape: f32[16,128], index: 0, kind: input, shape index: {}]
  %s1 = inlined_call_operand.vmem [shape: f32[128,4], index: 1, kind: input, shape index: {}]
  %s2 = inlined_call_operand.vmem [shape: f32[4,128], index: 2, kind: input, shape index: {}]
  %s3 = inlined_call_operand.vmem [shape: f32[1,128], index: 3, kind: input, shape index: {}]
  %s4 = inlined_call_operand.vmem [shape: f32[2,16,16], index: 4, kind: input, shape index: {}]
  %s5 = inlined_call_operand.vmem [shape: f32[2,8,16], index: 5, kind: input, shape index: {}]
  %s6 = inlined_call_operand.hbm [shape: f32[2,128,384], index: 6, kind: input, shape index: {}]
  %s7 = inlined_call_operand.vmem [shape: f32[2,1,384], index: 7, kind: input, shape index: {}]
  %s8 = inlined_call_operand.hbm [shape: f32[2,128,128], index: 8, kind: input, shape index: {}]
  %s9 = inlined_call_operand.vmem [shape: f32[2,1,128], index: 9, kind: input, shape index: {}]
  %s10 = inlined_call_operand.vmem [shape: f32[2,1,128], index: 10, kind: input, shape index: {}]
  %s11 = inlined_call_operand.vmem [shape: f32[2,1,128], index: 11, kind: input, shape index: {}]
  %s12 = inlined_call_operand.vmem [shape: f32[2,128,256], index: 12, kind: input, shape index: {}]
  %s13 = inlined_call_operand.vmem [shape: f32[2,1,256], index: 13, kind: input, shape index: {}]
  %s14 = inlined_call_operand.hbm [shape: f32[2,256,128], index: 14, kind: input, shape index: {}]
  %s15 = inlined_call_operand.vmem [shape: f32[2,1,128], index: 15, kind: input, shape index: {}]
  %s16 = inlined_call_operand.vmem [shape: f32[2,1,128], index: 16, kind: input, shape index: {}]
  %s17 = inlined_call_operand.vmem [shape: f32[2,1,128], index: 17, kind: input, shape index: {}]
  %s18 = inlined_call_operand.vmem [shape: f32[2,128,64], index: 18, kind: input, shape index: {}]
  %s19 = inlined_call_operand.vmem [shape: f32[1,64], index: 19, kind: input, shape index: {}]
  %s20 = inlined_call_operand.vmem [shape: f32[64,1], index: 20, kind: input, shape index: {}]
  %s21 = inlined_call_operand.<no memory space> [shape: f32[1,1], index: 21, kind: input, shape index: {}]
  %s22 = inlined_call_operand.vmem [shape: f32[8,1], index: 22, kind: output, shape index: {}]
  %s23 = sld [smem:[#allocation0]]
  $region110: #{forward.1} parent=0
    _
  %s25 = ssub.s32 1, %s23
  %s26 = scalar_select 0, %s25, %s23
  %v27 = vstv %s21
  %28 = vst [vmem:[#allocation2] sm:$0x1] %v27
  $region1: #{forward.1} parent=0
    #allocation3 [shape = 'u8[393216]{0}', space=vmem, size = 0x60000, scoped, tag = 'input window, operand 6, single buffered']
    #allocation4 [shape = 's32[1]{0}', space=sflag, size = 0x4, scoped, tag = 'scoped memory for forward.1']
    #allocation5 [shape = 'u8[131072]{0}', space=vmem, size = 0x20000, scoped, tag = 'input window, operand 8, single buffered']
    #allocation6 [shape = 's32[1]{0}', space=sflag, size = 0x4, scoped, tag = 'scoped memory for forward.1']
    #allocation7 [shape = 'u8[262144]{0}', space=vmem, size = 0x40000, scoped, tag = 'input window, operand 14, single buffered']
    %29 = vsyncpa [#allocation4], 0
    %30 = vsyncpa [#allocation6], 0
    // Predicated region
    $region2: #{forward.1} parent=1 // pred_check
      _
    $region3: #{forward.1} parent=1 // pred_check_branch
      %32 = sbr.rel (0) target = $region5
    $region4: #{forward.1} parent=1 // pred_region
      _
    $region5: #{forward.1} parent=1 // pred_fallthru
      _
    // Predicated region
    $region6: #{forward.1} parent=1 // pred_check
      _
    $region7: #{forward.1} parent=1 // pred_check_branch
      %34 = sbr.rel (0) target = $region9
    $region8: #{forward.1} parent=1 // pred_region
      _
    $region9: #{forward.1} parent=1 // pred_fallthru
      _
    // Predicated region
    $region10: #{forward.1} parent=1 // pred_check
      _
    $region11: #{forward.1} parent=1 // pred_check_branch
      %36 = sbr.rel (0) target = $region13
    $region12: #{forward.1} parent=1 // pred_region
      _
    $region13: #{forward.1} parent=1 // pred_fallthru
      _
    // Predicated region
    $region14: #{forward.1} parent=1 // pred_check
      _
    $region15: #{forward.1} parent=1 // pred_check_branch
      %38 = sbr.rel (0) target = $region17
    $region16: #{forward.1} parent=1 // pred_region
      _
    $region17: #{forward.1} parent=1 // pred_fallthru
      _
    // Predicated region
    $region18: #{forward.1} parent=1 // pred_check
      _
    $region19: #{forward.1} parent=1 // pred_check_branch
      %40 = sbr.rel (0) target = $region21
    $region20: #{forward.1} parent=1 // pred_region
      _
    $region21: #{forward.1} parent=1 // pred_fallthru
      _
    // Predicated region
    $region22: #{forward.1} parent=1 // pred_check
      _
    $region23: #{forward.1} parent=1 // pred_check_branch
      %42 = sbr.rel (0) target = $region25
    $region24: #{forward.1} parent=1 // pred_region
      _
    $region25: #{forward.1} parent=1 // pred_fallthru
      _
    // Predicated region
    $region26: #{forward.1} parent=1 // pred_check
      _
    $region27: #{forward.1} parent=1 // pred_check_branch
      %44 = sbr.rel (0) target = $region29
    $region28: #{forward.1} parent=1 // pred_region
      %46 = vsyncadd [#allocation4], 0
      %s47 = sshll.u32 %s6, 4
      %s48 = int_to_ptr.hbm [resolvable:$true] %s47
      %s49 = sshll.u32 [#allocation3], 4
      %s50 = int_to_ptr.vmem [resolvable:$true] %s49
      %55 = dma.hbm_to_vmem [thread:$0]  %s48, 12288, %s50, [#allocation4], 384, 384, 24
    $region29: #{forward.1} parent=1 // pred_fallthru
      _
    // Predicated region
    $region30: #{forward.1} parent=1 // pred_check
      _
    $region31: #{forward.1} parent=1 // pred_check_branch
      %57 = sbr.rel (0) target = $region33
    $region32: #{forward.1} parent=1 // pred_region
      _
    $region33: #{forward.1} parent=1 // pred_fallthru
      _
    // Predicated region
    $region34: #{forward.1} parent=1 // pred_check
      _
    $region35: #{forward.1} parent=1 // pred_check_branch
      %59 = sbr.rel (0) target = $region37
    $region36: #{forward.1} parent=1 // pred_region
      %61 = vsyncadd [#allocation6], 0
      %s62 = sshll.u32 %s8, 4
      %s63 = int_to_ptr.hbm [resolvable:$true] %s62
      %s64 = sshll.u32 [#allocation5], 4
      %s65 = int_to_ptr.vmem [resolvable:$true] %s64
      %70 = dma.hbm_to_vmem [thread:$0]  %s63, 4096, %s65, [#allocation6], 128, 128, 8
    $region37: #{forward.1} parent=1 // pred_fallthru
      _
    // Predicated region
    $region38: #{forward.1} parent=1 // pred_check
      _
    $region39: #{forward.1} parent=1 // pred_check_branch
      %72 = sbr.rel (0) target = $region41
    $region40: #{forward.1} parent=1 // pred_region
      _
    $region41: #{forward.1} parent=1 // pred_fallthru
      _
    // Predicated region
    $region42: #{forward.1} parent=1 // pred_check
      _
    $region43: #{forward.1} parent=1 // pred_check_branch
      %74 = sbr.rel (0) target = $region45
    $region44: #{forward.1} parent=1 // pred_region
      _
    $region45: #{forward.1} parent=1 // pred_fallthru
      _
    // Predicated region
    $region46: #{forward.1} parent=1 // pred_check
      _
    $region47: #{forward.1} parent=1 // pred_check_branch
      %76 = sbr.rel (0) target = $region49
    $region48: #{forward.1} parent=1 // pred_region
      _
    $region49: #{forward.1} parent=1 // pred_fallthru
      _
    // Predicated region
    $region50: #{forward.1} parent=1 // pred_check
      _
    $region51: #{forward.1} parent=1 // pred_check_branch
      %78 = sbr.rel (0) target = $region53
    $region52: #{forward.1} parent=1 // pred_region
      _
    $region53: #{forward.1} parent=1 // pred_fallthru
      _
    // Predicated region
    $region54: #{forward.1} parent=1 // pred_check
      _
    $region55: #{forward.1} parent=1 // pred_check_branch
      %80 = sbr.rel (0) target = $region57
    $region56: #{forward.1} parent=1 // pred_region
      _
    $region57: #{forward.1} parent=1 // pred_fallthru
      _
    // Predicated region
    $region58: #{forward.1} parent=1 // pred_check
      _
    $region59: #{forward.1} parent=1 // pred_check_branch
      %82 = sbr.rel (0) target = $region61
    $region60: #{forward.1} parent=1 // pred_region
      %84 = vsyncadd [#allocation6], 0
      %s85 = sshll.u32 %s14, 4
      %s86 = int_to_ptr.hbm [resolvable:$true] %s85
      %s87 = sshll.u32 [#allocation7], 4
      %s88 = int_to_ptr.vmem [resolvable:$true] %s87
      %93 = dma.hbm_to_vmem [thread:$0]  %s86, 8192, %s88, [#allocation6], 128, 128, 8
    $region61: #{forward.1} parent=1 // pred_fallthru
      _
    // Predicated region
    $region62: #{forward.1} parent=1 // pred_check
      _
    $region63: #{forward.1} parent=1 // pred_check_branch
      %95 = sbr.rel (0) target = $region65
    $region64: #{forward.1} parent=1 // pred_region
      _
    $region65: #{forward.1} parent=1 // pred_fallthru
      _
    // Predicated region
    $region66: #{forward.1} parent=1 // pred_check
      _
    $region67: #{forward.1} parent=1 // pred_check_branch
      %97 = sbr.rel (0) target = $region69
    $region68: #{forward.1} parent=1 // pred_region
      _
    $region69: #{forward.1} parent=1 // pred_fallthru
      _
    // Predicated region
    $region70: #{forward.1} parent=1 // pred_check
      _
    $region71: #{forward.1} parent=1 // pred_check_branch
      %99 = sbr.rel (0) target = $region73
    $region72: #{forward.1} parent=1 // pred_region
      _
    $region73: #{forward.1} parent=1 // pred_fallthru
      _
    // Predicated region
    $region74: #{forward.1} parent=1 // pred_check
      _
    $region75: #{forward.1} parent=1 // pred_check_branch
      %101 = sbr.rel (0) target = $region77
    $region76: #{forward.1} parent=1 // pred_region
      _
    $region77: #{forward.1} parent=1 // pred_fallthru
      _
    // Predicated region
    $region78: #{forward.1} parent=1 // pred_check
      _
    $region79: #{forward.1} parent=1 // pred_check_branch
      %103 = sbr.rel (0) target = $region81
    $region80: #{forward.1} parent=1 // pred_region
      _
    $region81: #{forward.1} parent=1 // pred_fallthru
      _
    // Predicated region
    $region82: #{forward.1} parent=1 // pred_check
      _
    $region83: #{forward.1} parent=1 // pred_check_branch
      %105 = sbr.rel (0) target = $region85
    $region84: #{forward.1} parent=1 // pred_region
      _
    $region85: #{forward.1} parent=1 // pred_fallthru
      _
    // Predicated region
    $region86: #{forward.1} parent=1 // pred_check
      _
    $region87: #{forward.1} parent=1 // pred_check_branch
      %107 = sbr.rel (0) target = $region89
    $region88: #{forward.1} parent=1 // pred_region
      _
    $region89: #{forward.1} parent=1 // pred_fallthru
      _
    // Predicated region
    $region90: #{forward.1} parent=1 // pred_check
      _
    $region91: #{forward.1} parent=1 // pred_check_branch
      %109 = sbr.rel (0) target = $region93
    $region92: #{forward.1} parent=1 // pred_region
      %111 = dma.done [#allocation4], 12288
    $region93: #{forward.1} parent=1 // pred_fallthru
      _
    // Predicated region
    $region94: #{forward.1} parent=1 // pred_check
      _
    $region95: #{forward.1} parent=1 // pred_check_branch
      %113 = sbr.rel (0) target = $region97
    $region96: #{forward.1} parent=1 // pred_region
      %115 = dma.done [#allocation6], 4096
    $region97: #{forward.1} parent=1 // pred_fallthru
      _
    // Predicated region
    $region98: #{forward.1} parent=1 // pred_check
      _
    $region99: #{forward.1} parent=1 // pred_check_branch
      %117 = sbr.rel (0) target = $region101
    $region100: #{forward.1} parent=1 // pred_region
      %119 = dma.done [#allocation6], 8192
    $region101: #{forward.1} parent=1 // pred_fallthru
      _
    %v120 = vld [vmem:[%s1] sm:$0xff]
    %v121 = vld [vmem:[%s1 + $0x8] sm:$0xff]
    %v122 = vld [vmem:[%s1 + $0x10] sm:$0xff]
    %v123 = vld [vmem:[%s1 + $0x18] sm:$0xff]
    %v124 = vld [vmem:[%s1 + $0x20] sm:$0xff]
    %v125 = vld [vmem:[%s1 + $0x28] sm:$0xff]
    %v126 = vld [vmem:[%s1 + $0x30] sm:$0xff]
    %v127 = vld [vmem:[%s1 + $0x38] sm:$0xff]
    %v128 = vld [vmem:[%s1 + $0x40] sm:$0xff]
    %v129 = vld [vmem:[%s1 + $0x48] sm:$0xff]
    %v130 = vld [vmem:[%s1 + $0x50] sm:$0xff]
    %v131 = vld [vmem:[%s1 + $0x58] sm:$0xff]
    %v132 = vld [vmem:[%s1 + $0x60] sm:$0xff]
    %v133 = vld [vmem:[%s1 + $0x68] sm:$0xff]
    %v134 = vld [vmem:[%s1 + $0x70] sm:$0xff]
    %v135 = vld [vmem:[%s1 + $0x78] sm:$0xff]
    %v136 = vld [vmem:[%s2] sm:$0xf]
    %v137 = vld [vmem:[%s3] sm:$0x1]
    %v138 = vld [vmem:[%s0] sm:$0xff]
    %v139 = vld [vmem:[%s0 + $0x8] sm:$0xff]
    %v140 = vld [vmem:[#allocation3] sm:$0xff]
    %v141 = vld [vmem:[#allocation3 + $0x8] sm:$0xff]
    %v142 = vld [vmem:[#allocation3 + $0x10] sm:$0xff]
    %v143 = vld [vmem:[#allocation3 + $0x18] sm:$0xff]
    %v144 = vld [vmem:[#allocation3 + $0x20] sm:$0xff]
    %v145 = vld [vmem:[#allocation3 + $0x28] sm:$0xff]
    %v146 = vld [vmem:[#allocation3 + $0x30] sm:$0xff]
    %v147 = vld [vmem:[#allocation3 + $0x38] sm:$0xff]
    %v148 = vld [vmem:[#allocation3 + $0x40] sm:$0xff]
    %v149 = vld [vmem:[#allocation3 + $0x48] sm:$0xff]
    %v150 = vld [vmem:[#allocation3 + $0x50] sm:$0xff]
    %v151 = vld [vmem:[#allocation3 + $0x58] sm:$0xff]
    %v152 = vld [vmem:[#allocation3 + $0x60] sm:$0xff]
    %v153 = vld [vmem:[#allocation3 + $0x68] sm:$0xff]
    %v154 = vld [vmem:[#allocation3 + $0x70] sm:$0xff]
    %v155 = vld [vmem:[#allocation3 + $0x78] sm:$0xff]
    %v156 = vld [vmem:[#allocation3 + $0x80] sm:$0xff]
    %v157 = vld [vmem:[#allocation3 + $0x88] sm:$0xff]
    %v158 = vld [vmem:[#allocation3 + $0x90] sm:$0xff]
    %v159 = vld [vmem:[#allocation3 + $0x98] sm:$0xff]
    %v160 = vld [vmem:[#allocation3 + $0xa0] sm:$0xff]
    %v161 = vld [vmem:[#allocation3 + $0xa8] sm:$0xff]
    %v162 = vld [vmem:[#allocation3 + $0xb0] sm:$0xff]
    %v163 = vld [vmem:[#allocation3 + $0xb8] sm:$0xff]
    %v164 = vld [vmem:[#allocation3 + $0xc0] sm:$0xff]
    %v165 = vld [vmem:[#allocation3 + $0xc8] sm:$0xff]
    %v166 = vld [vmem:[#allocation3 + $0xd0] sm:$0xff]
    %v167 = vld [vmem:[#allocation3 + $0xd8] sm:$0xff]
    %v168 = vld [vmem:[#allocation3 + $0xe0] sm:$0xff]
    %v169 = vld [vmem:[#allocation3 + $0xe8] sm:$0xff]
    %v170 = vld [vmem:[#allocation3 + $0xf0] sm:$0xff]
    %v171 = vld [vmem:[#allocation3 + $0xf8] sm:$0xff]
    %v172 = vld [vmem:[#allocation3 + $0x100] sm:$0xff]
    %v173 = vld [vmem:[#allocation3 + $0x108] sm:$0xff]
    %v174 = vld [vmem:[#allocation3 + $0x110] sm:$0xff]
    %v175 = vld [vmem:[#allocation3 + $0x118] sm:$0xff]
    %v176 = vld [vmem:[#allocation3 + $0x120] sm:$0xff]
    %v177 = vld [vmem:[#allocation3 + $0x128] sm:$0xff]
    %v178 = vld [vmem:[#allocation3 + $0x130] sm:$0xff]
    %v179 = vld [vmem:[#allocation3 + $0x138] sm:$0xff]
    %v180 = vld [vmem:[#allocation3 + $0x140] sm:$0xff]
    %v181 = vld [vmem:[#allocation3 + $0x148] sm:$0xff]
    %v182 = vld [vmem:[#allocation3 + $0x150] sm:$0xff]
    %v183 = vld [vmem:[#allocation3 + $0x158] sm:$0xff]
    %v184 = vld [vmem:[#allocation3 + $0x160] sm:$0xff]
    %v185 = vld [vmem:[#allocation3 + $0x168] sm:$0xff]
    %v186 = vld [vmem:[#allocation3 + $0x170] sm:$0xff]
    %v187 = vld [vmem:[#allocation3 + $0x178] sm:$0xff]
    %v188 = vld [vmem:[%s7] sm:$0x7]
    %v190 = vperm.slane %v188, 0
    %v191 = vperm.slane %v188, 1
    %v192 = vperm.slane %v188, 2
    %196 = vmatpush.msra.mxu0 %v185
    %197 = vmatpush.msra.mxu0 %v182
    %198 = vmatpush.msra.mxu0 %v179
    %199 = vmatpush.msra.mxu0 %v176
    %200 = vmatpush.msra.mxu0 %v173
    %201 = vmatpush.msra.mxu0 %v170
    %202 = vmatpush.msra.mxu0 %v167
    %203 = vmatpush.msra.mxu0 %v164
    %204 = vmatpush.msra.mxu0 %v161
    %205 = vmatpush.msra.mxu0 %v158
    %206 = vmatpush.msra.mxu0 %v155
    %207 = vmatpush.msra.mxu0 %v152
    %208 = vmatpush.msra.mxu0 %v149
    %209 = vmatpush.msra.mxu0 %v146
    %210 = vmatpush.msra.mxu0 %v143
    %211 = vmatpush.msra.mxu0 %v140
    %212 = vmatmul.f32.gmra.mxu0 %v138
    %v213 = vpop.f32.mrf.mxu0
    %v214 = vadd.f32 %v190, %v213
    %215 = vmatmul.f32.gmra.mxu0 %v139
    %v216 = vpop.f32.mrf.mxu0
    %v217 = vadd.f32 %v190, %v216
    %218 = vdwg.mxu0
    %219 = vmatpush.msra.mxu0 %v186
    %220 = vmatpush.msra.mxu0 %v183
    %221 = vmatpush.msra.mxu0 %v180
    %222 = vmatpush.msra.mxu0 %v177
    %223 = vmatpush.msra.mxu0 %v174
    %224 = vmatpush.msra.mxu0 %v171
    %225 = vmatpush.msra.mxu0 %v168
    %226 = vmatpush.msra.mxu0 %v165
    %227 = vmatpush.msra.mxu0 %v162
    %228 = vmatpush.msra.mxu0 %v159
    %229 = vmatpush.msra.mxu0 %v156
    %230 = vmatpush.msra.mxu0 %v153
    %231 = vmatpush.msra.mxu0 %v150
    %232 = vmatpush.msra.mxu0 %v147
    %233 = vmatpush.msra.mxu0 %v144
    %234 = vmatpush.msra.mxu0 %v141
    %235 = vmatmul.f32.gmra.mxu0 %v138
    %v236 = vpop.f32.mrf.mxu0
    %v237 = vadd.f32 %v191, %v236
    %238 = vmatmul.f32.gmra.mxu0 %v139
    %v239 = vpop.f32.mrf.mxu0
    %v240 = vadd.f32 %v191, %v239
    %241 = vdwg.mxu0
    %242 = vmatpush.msra.mxu0 %v187
    %243 = vmatpush.msra.mxu0 %v184
    %244 = vmatpush.msra.mxu0 %v181
    %245 = vmatpush.msra.mxu0 %v178
    %246 = vmatpush.msra.mxu0 %v175
    %247 = vmatpush.msra.mxu0 %v172
    %248 = vmatpush.msra.mxu0 %v169
    %249 = vmatpush.msra.mxu0 %v166
    %250 = vmatpush.msra.mxu0 %v163
    %251 = vmatpush.msra.mxu0 %v160
    %252 = vmatpush.msra.mxu0 %v157
    %253 = vmatpush.msra.mxu0 %v154
    %254 = vmatpush.msra.mxu0 %v151
    %255 = vmatpush.msra.mxu0 %v148
    %256 = vmatpush.msra.mxu0 %v145
    %257 = vmatpush.msra.mxu0 %v142
    %258 = vmatmul.f32.gmra.mxu0 %v138
    %v259 = vpop.f32.mrf.mxu0
    %v260 = vadd.f32 %v192, %v259
    %261 = vmatmul.f32.gmra.mxu0 %v139
    %v262 = vpop.f32.mrf.mxu0
    %v263 = vadd.f32 %v192, %v262
    %264 = vdwg.mxu0
    %v265 = vld [vmem:[%s4] sm:$0xff]
    %v266 = vld [vmem:[%s4 + $0x8] sm:$0xff]
    %vm267 = vcmask 130048
    %v269 = vsel %vm267, %v265, 0
    %v272 = vsel %vm267, %v266, 0
    %274 = vmatpush.msra.mxu0 0.0
    %275 = vmatpush.msra.mxu0 0.0
    %276 = vmatpush.msra.mxu0 0.0
    %277 = vmatpush.msra.mxu0 0.0
    %278 = vmatpush.msra.mxu0 0.0
    %279 = vmatpush.msra.mxu0 0.0
    %280 = vmatpush.msra.mxu0 0.0
    %281 = vmatpush.msra.mxu0 0.0
    %282 = vmatpush.msra.mxu0 0.0
    %283 = vmatpush.msra.mxu0 0.0
    %284 = vmatpush.msra.mxu0 0.0
    %285 = vmatpush.msra.mxu0 0.0
    %286 = vmatpush.msra.mxu0 0.0
    %287 = vmatpush.msra.mxu0 0.0
    %288 = vmatpush.msra.mxu0 %v240
    %289 = vmatpush.msra.mxu0 %v237
    %290 = vmatmul.f32.gmra.mxu0 %v269
    %v291 = vpop.f32.mrf.mxu0
    %v292 = vadd.f32 0.0, %v291
    %293 = vmatmul.f32.gmra.mxu0 %v272
    %v294 = vpop.f32.mrf.mxu0
    %v295 = vadd.f32 0.0, %v294
    %296 = vdwg.mxu0
    %297 = vmatpush.msra.mxu0 0.0
    %298 = vmatpush.msra.mxu0 0.0
    %299 = vmatpush.msra.mxu0 0.0
    %300 = vmatpush.msra.mxu0 0.0
    %301 = vmatpush.msra.mxu0 0.0
    %302 = vmatpush.msra.mxu0 0.0
    %303 = vmatpush.msra.mxu0 0.0
    %304 = vmatpush.msra.mxu0 0.0
    %305 = vmatpush.msra.mxu0 0.0
    %306 = vmatpush.msra.mxu0 0.0
    %307 = vmatpush.msra.mxu0 0.0
    %308 = vmatpush.msra.mxu0 0.0
    %309 = vmatpush.msra.mxu0 0.0
    %310 = vmatpush.msra.mxu0 0.0
    %311 = vmatpush.msra.mxu0 %v263
    %312 = vmatpush.msra.mxu0 %v260
    %313 = vmatmul.f32.gmra.mxu0 %v269
    %v314 = vpop.f32.mrf.mxu0
    %v315 = vadd.f32 0.0, %v314
    %316 = vmatmul.f32.gmra.mxu0 %v272
    %v317 = vpop.f32.mrf.mxu0
    %v318 = vadd.f32 0.0, %v317
    %319 = vdwg.mxu0
    %v320 = vmul.f32 %v214, %v292
    %v321 = vmul.f32 %v217, %v295
    %322 = vmatpush.msra.mxu0 %v135
    %323 = vmatpush.msra.mxu0 %v134
    %324 = vmatpush.msra.mxu0 %v133
    %325 = vmatpush.msra.mxu0 %v132
    %326 = vmatpush.msra.mxu0 %v131
    %327 = vmatpush.msra.mxu0 %v130
    %328 = vmatpush.msra.mxu0 %v129
    %329 = vmatpush.msra.mxu0 %v128
    %330 = vmatpush.msra.mxu0 %v127
    %331 = vmatpush.msra.mxu0 %v126
    %332 = vmatpush.msra.mxu0 %v125
    %333 = vmatpush.msra.mxu0 %v124
    %334 = vmatpush.msra.mxu0 %v123
    %335 = vmatpush.msra.mxu0 %v122
    %336 = vmatpush.msra.mxu0 %v121
    %337 = vmatpush.msra.mxu0 %v120
    %338 = vmatmul.f32.gmra.mxu0 %v320
    %v339 = vpop.f32.mrf.mxu0
    %v340 = vadd.f32 0.0, %v339
    %341 = vmatmul.f32.gmra.mxu0 %v321
    %v342 = vpop.f32.mrf.mxu0
    %v343 = vadd.f32 0.0, %v342
    %344 = vdwg.mxu0
    %s345 = scalar_lea.vmem %s4, 16
    %v346 = vld [vmem:[%s345] sm:$0xff]
    %v347 = vld [vmem:[%s345 + $0x8] sm:$0xff]
    %v349 = vsel %vm267, %v346, 0
    %v352 = vsel %vm267, %v347, 0
    %354 = vmatpush.msra.mxu0 0.0
    %355 = vmatpush.msra.mxu0 0.0
    %356 = vmatpush.msra.mxu0 0.0
    %357 = vmatpush.msra.mxu0 0.0
    %358 = vmatpush.msra.mxu0 0.0
    %359 = vmatpush.msra.mxu0 0.0
    %360 = vmatpush.msra.mxu0 0.0
    %361 = vmatpush.msra.mxu0 0.0
    %362 = vmatpush.msra.mxu0 0.0
    %363 = vmatpush.msra.mxu0 0.0
    %364 = vmatpush.msra.mxu0 0.0
    %365 = vmatpush.msra.mxu0 0.0
    %366 = vmatpush.msra.mxu0 0.0
    %367 = vmatpush.msra.mxu0 0.0
    %368 = vmatpush.msra.mxu0 %v240
    %369 = vmatpush.msra.mxu0 %v237
    %370 = vmatmul.f32.gmra.mxu0 %v349
    %v371 = vpop.f32.mrf.mxu0
    %v372 = vadd.f32 0.0, %v371
    %373 = vmatmul.f32.gmra.mxu0 %v352
    %v374 = vpop.f32.mrf.mxu0
    %v375 = vadd.f32 0.0, %v374
    %376 = vdwg.mxu0
    %377 = vmatpush.msra.mxu0 0.0
    %378 = vmatpush.msra.mxu0 0.0
    %379 = vmatpush.msra.mxu0 0.0
    %380 = vmatpush.msra.mxu0 0.0
    %381 = vmatpush.msra.mxu0 0.0
    %382 = vmatpush.msra.mxu0 0.0
    %383 = vmatpush.msra.mxu0 0.0
    %384 = vmatpush.msra.mxu0 0.0
    %385 = vmatpush.msra.mxu0 0.0
    %386 = vmatpush.msra.mxu0 0.0
    %387 = vmatpush.msra.mxu0 0.0
    %388 = vmatpush.msra.mxu0 0.0
    %389 = vmatpush.msra.mxu0 0.0
    %390 = vmatpush.msra.mxu0 0.0
    %391 = vmatpush.msra.mxu0 %v263
    %392 = vmatpush.msra.mxu0 %v260
    %393 = vmatmul.f32.gmra.mxu0 %v349
    %v394 = vpop.f32.mrf.mxu0
    %v395 = vadd.f32 0.0, %v394
    %396 = vmatmul.f32.gmra.mxu0 %v352
    %v397 = vpop.f32.mrf.mxu0
    %v398 = vadd.f32 0.0, %v397
    %399 = vdwg.mxu0
    %v400 = vmul.f32 %v214, %v372
    %v401 = vmul.f32 %v217, %v375
    %402 = vmatpush.msra.mxu0 %v135
    %403 = vmatpush.msra.mxu0 %v134
    %404 = vmatpush.msra.mxu0 %v133
    %405 = vmatpush.msra.mxu0 %v132
    %406 = vmatpush.msra.mxu0 %v131
    %407 = vmatpush.msra.mxu0 %v130
    %408 = vmatpush.msra.mxu0 %v129
    %409 = vmatpush.msra.mxu0 %v128
    %410 = vmatpush.msra.mxu0 %v127
    %411 = vmatpush.msra.mxu0 %v126
    %412 = vmatpush.msra.mxu0 %v125
    %413 = vmatpush.msra.mxu0 %v124
    %414 = vmatpush.msra.mxu0 %v123
    %415 = vmatpush.msra.mxu0 %v122
    %416 = vmatpush.msra.mxu0 %v121
    %417 = vmatpush.msra.mxu0 %v120
    %418 = vmatmul.f32.gmra.mxu0 %v400
    %v419 = vpop.f32.mrf.mxu0
    %v420 = vadd.f32 0.0, %v419
    %421 = vmatmul.f32.gmra.mxu0 %v401
    %v422 = vpop.f32.mrf.mxu0
    %v423 = vadd.f32 0.0, %v422
    %424 = vdwg.mxu0
    %v425 = vmax.f32 %v340, %v420
    %v426 = vmax.f32 %v343, %v423
    %v427 = vsub.f32 %v340, %v425
    %v428 = vsub.f32 %v343, %v426
    %v429 = vmul.f32 %v427, 1.442695
    %v430 = vpow.pop %v429
    %v431 = vmul.f32 %v428, 1.442695
    %v432 = vpow.pop %v431
    %v433 = vsub.f32 %v420, %v425
    %v434 = vsub.f32 %v423, %v426
    %v435 = vmul.f32 %v433, 1.442695
    %v436 = vpow.pop %v435
    %v437 = vmul.f32 %v434, 1.442695
    %v438 = vpow.pop %v437
    %v439 = vadd.f32 %v430, %v436
    %v440 = vadd.f32 %v432, %v438
    %v441 = vrcp.pop %v439
    %v442 = vmul.f32 %v439, %v441
    %v443 = vsub.f32 1.0, %v442
    %v444 = vmul.f32 %v441, %v443
    %v445 = vadd.f32 %v441, %v444
    %vm446 = vweird.f32 %v439
    %vm447 = vweird.f32 %v441
    %vm448 = vmor %vm446, %vm447
    %v449 = vsel %vm448, %v441, %v445
    %v450 = vand.u32 2147483647, %v439
    %vm451 = vcmp.eq.f32.partialorder %v450, 8.507059e+37
    %v452 = vand.u32 %v439, 2147483648
    %v453 = vor.u32 1.1754944e-38, %v452
    %v454 = vsel %vm451, %v453, %v449
    %v455 = vmul.f32 1.0, %v454
    %v456 = vrcp.pop %v440
    %v457 = vmul.f32 %v440, %v456
    %v458 = vsub.f32 1.0, %v457
    %v459 = vmul.f32 %v456, %v458
    %v460 = vadd.f32 %v456, %v459
    %vm461 = vweird.f32 %v440
    %vm462 = vweird.f32 %v456
    %vm463 = vmor %vm461, %vm462
    %v464 = vsel %vm463, %v456, %v460
    %v465 = vand.u32 2147483647, %v440
    %vm466 = vcmp.eq.f32.partialorder %v465, 8.507059e+37
    %v467 = vand.u32 %v440, 2147483648
    %v468 = vor.u32 1.1754944e-38, %v467
    %v469 = vsel %vm466, %v468, %v464
    %v470 = vmul.f32 1.0, %v469
    %v471 = vmul.f32 %v430, %v455
    %v472 = vmul.f32 %v432, %v470
    %vm473 = vcmask 31744
    %v475 = vsel %vm473, %v471, 0
    %v478 = vsel %vm473, %v472, 0
    %vm480 = vcmask 1043456
    %v482 = vsel %vm480, %v136, 0
    %484 = vmatpush.msra.mxu0 0.0
    %485 = vmatpush.msra.mxu0 0.0
    %486 = vmatpush.msra.mxu0 0.0
    %487 = vmatpush.msra.mxu0 0.0
    %488 = vmatpush.msra.mxu0 0.0
    %489 = vmatpush.msra.mxu0 0.0
    %490 = vmatpush.msra.mxu0 0.0
    %491 = vmatpush.msra.mxu0 0.0
    %492 = vmatpush.msra.mxu0 0.0
    %493 = vmatpush.msra.mxu0 0.0
    %494 = vmatpush.msra.mxu0 0.0
    %495 = vmatpush.msra.mxu0 0.0
    %496 = vmatpush.msra.mxu0 0.0
    %497 = vmatpush.msra.mxu0 0.0
    %498 = vmatpush.msra.mxu0 0.0
    %499 = vmatpush.msra.mxu0 %v482
    %500 = vmatmul.f32.gmra.mxu0 %v475
    %v501 = vpop.f32.mrf.mxu0
    %v502 = vadd.f32 0.0, %v501
    %503 = vmatmul.f32.gmra.mxu0 %v478
    %v504 = vpop.f32.mrf.mxu0
    %v505 = vadd.f32 0.0, %v504
    %506 = vdwg.mxu0
    %v507 = vmul.f32 %v502, %v315
    %v508 = vmul.f32 %v505, %v318
    %v509 = vmul.f32 %v436, %v455
    %v510 = vmul.f32 %v438, %v470
    %v512 = vsel %vm473, %v509, 0
    %v515 = vsel %vm473, %v510, 0
    %517 = vmatpush.msra.mxu0 0.0
    %518 = vmatpush.msra.mxu0 0.0
    %519 = vmatpush.msra.mxu0 0.0
    %520 = vmatpush.msra.mxu0 0.0
    %521 = vmatpush.msra.mxu0 0.0
    %522 = vmatpush.msra.mxu0 0.0
    %523 = vmatpush.msra.mxu0 0.0
    %524 = vmatpush.msra.mxu0 0.0
    %525 = vmatpush.msra.mxu0 0.0
    %526 = vmatpush.msra.mxu0 0.0
    %527 = vmatpush.msra.mxu0 0.0
    %528 = vmatpush.msra.mxu0 0.0
    %529 = vmatpush.msra.mxu0 0.0
    %530 = vmatpush.msra.mxu0 0.0
    %531 = vmatpush.msra.mxu0 0.0
    %532 = vmatpush.msra.mxu0 %v482
    %533 = vmatmul.f32.gmra.mxu0 %v512
    %v534 = vpop.f32.mrf.mxu0
    %v535 = vadd.f32 0.0, %v534
    %536 = vmatmul.f32.gmra.mxu0 %v515
    %v537 = vpop.f32.mrf.mxu0
    %v538 = vadd.f32 0.0, %v537
    %539 = vdwg.mxu0
    %v540 = vmul.f32 %v535, %v395
    %v541 = vmul.f32 %v538, %v398
    %v542 = vadd.f32 %v507, %v540
    %v543 = vadd.f32 %v508, %v541
    %v544 = vld [vmem:[#allocation5] sm:$0xff]
    %v545 = vld [vmem:[#allocation5 + $0x8] sm:$0xff]
    %v546 = vld [vmem:[#allocation5 + $0x10] sm:$0xff]
    %v547 = vld [vmem:[#allocation5 + $0x18] sm:$0xff]
    %v548 = vld [vmem:[#allocation5 + $0x20] sm:$0xff]
    %v549 = vld [vmem:[#allocation5 + $0x28] sm:$0xff]
    %v550 = vld [vmem:[#allocation5 + $0x30] sm:$0xff]
    %v551 = vld [vmem:[#allocation5 + $0x38] sm:$0xff]
    %v552 = vld [vmem:[#allocation5 + $0x40] sm:$0xff]
    %v553 = vld [vmem:[#allocation5 + $0x48] sm:$0xff]
    %v554 = vld [vmem:[#allocation5 + $0x50] sm:$0xff]
    %v555 = vld [vmem:[#allocation5 + $0x58] sm:$0xff]
    %v556 = vld [vmem:[#allocation5 + $0x60] sm:$0xff]
    %v557 = vld [vmem:[#allocation5 + $0x68] sm:$0xff]
    %v558 = vld [vmem:[#allocation5 + $0x70] sm:$0xff]
    %v559 = vld [vmem:[#allocation5 + $0x78] sm:$0xff]
    %v560 = vld [vmem:[%s9] sm:$0x1]
    %v562 = vperm.slane %v560, 0
    %564 = vmatpush.msra.mxu0 %v559
    %565 = vmatpush.msra.mxu0 %v558
    %566 = vmatpush.msra.mxu0 %v557
    %567 = vmatpush.msra.mxu0 %v556
    %568 = vmatpush.msra.mxu0 %v555
    %569 = vmatpush.msra.mxu0 %v554
    %570 = vmatpush.msra.mxu0 %v553
    %571 = vmatpush.msra.mxu0 %v552
    %572 = vmatpush.msra.mxu0 %v551
    %573 = vmatpush.msra.mxu0 %v550
    %574 = vmatpush.msra.mxu0 %v549
    %575 = vmatpush.msra.mxu0 %v548
    %576 = vmatpush.msra.mxu0 %v547
    %577 = vmatpush.msra.mxu0 %v546
    %578 = vmatpush.msra.mxu0 %v545
    %579 = vmatpush.msra.mxu0 %v544
    %580 = vmatmul.f32.gmra.mxu0 %v542
    %v581 = vpop.f32.mrf.mxu0
    %v582 = vadd.f32 %v562, %v581
    %583 = vmatmul.f32.gmra.mxu0 %v543
    %v584 = vpop.f32.mrf.mxu0
    %v585 = vadd.f32 %v562, %v584
    %586 = vdwg.mxu0
    %v587 = vadd.f32 %v138, %v582
    %v588 = vadd.f32 %v139, %v585
    %v589 = vld [vmem:[%s10] sm:$0x1]
    %v590 = vld [vmem:[%s11] sm:$0x1]
    %591 = vadd.xlane.f32.xlu0 %v587
    %v592 = vpop.xlane.xlu0 %591
    %593 = vadd.xlane.f32.xlu0 %v588
    %v594 = vpop.xlane.xlu0 %593
    %v595 = vmul.f32 %v592, 0.011363637
    %v596 = vmul.f32 %v594, 0.011363637
    %v597 = vsub.f32 %v587, %v595
    %v598 = vsub.f32 %v588, %v596
    %v600 = vperm.slane %v137, 0
    %v602 = vmul.f32 %v597, %v600
    %v603 = vmul.f32 %v598, %v600
    %v604 = vmul.f32 %v602, %v602
    %v605 = vmul.f32 %v603, %v603
    %606 = vadd.xlane.f32.xlu0 %v604
    %v607 = vpop.xlane.xlu0 %606
    %608 = vadd.xlane.f32.xlu0 %v605
    %v609 = vpop.xlane.xlu0 %608
    %v610 = vmul.f32 %v607, 0.011363637
    %v611 = vmul.f32 %v609, 0.011363637
    %v612 = vadd.f32 %v610, 1e-05
    %v613 = vadd.f32 %v611, 1e-05
    %v614 = vrsqrt.pop %v612
    %v615 = vmul.f32 %v614, %v612
    %v616 = vmul.f32 %v615, %v614
    %v617 = vmul.f32 0.5, %v616
    %v618 = vsub.f32 1.5, %v617
    %v619 = vmul.f32 %v614, %v618
    %vm620 = vweird.f32 %v612
    %vm621 = vweird.f32 %v614
    %vm622 = vmor %vm620, %vm621
    %v623 = vsel %vm622, %v614, %v619
    %v624 = vrsqrt.pop %v613
    %v625 = vmul.f32 %v624, %v613
    %v626 = vmul.f32 %v625, %v624
    %v627 = vmul.f32 0.5, %v626
    %v628 = vsub.f32 1.5, %v627
    %v629 = vmul.f32 %v624, %v628
    %vm630 = vweird.f32 %v613
    %vm631 = vweird.f32 %v624
    %vm632 = vmor %vm630, %vm631
    %v633 = vsel %vm632, %v624, %v629
    %v634 = vmul.f32 %v602, %v623
    %v635 = vmul.f32 %v603, %v633
    %v637 = vperm.slane %v589, 0
    %v639 = vmul.f32 %v634, %v637
    %v640 = vmul.f32 %v635, %v637
    %v642 = vperm.slane %v590, 0
    %v644 = vadd.f32 %v639, %v642
    %v645 = vadd.f32 %v640, %v642
    %v646 = vld [vmem:[%s12] sm:$0xff]
    %v647 = vld [vmem:[%s12 + $0x8] sm:$0xff]
    %v648 = vld [vmem:[%s12 + $0x10] sm:$0xff]
    %v649 = vld [vmem:[%s12 + $0x18] sm:$0xff]
    %v650 = vld [vmem:[%s12 + $0x20] sm:$0xff]
    %v651 = vld [vmem:[%s12 + $0x28] sm:$0xff]
    %v652 = vld [vmem:[%s12 + $0x30] sm:$0xff]
    %v653 = vld [vmem:[%s12 + $0x38] sm:$0xff]
    %v654 = vld [vmem:[%s12 + $0x40] sm:$0xff]
    %v655 = vld [vmem:[%s12 + $0x48] sm:$0xff]
    %v656 = vld [vmem:[%s12 + $0x50] sm:$0xff]
    %v657 = vld [vmem:[%s12 + $0x58] sm:$0xff]
    %v658 = vld [vmem:[%s12 + $0x60] sm:$0xff]
    %v659 = vld [vmem:[%s12 + $0x68] sm:$0xff]
    %v660 = vld [vmem:[%s12 + $0x70] sm:$0xff]
    %v661 = vld [vmem:[%s12 + $0x78] sm:$0xff]
    %v662 = vld [vmem:[%s12 + $0x80] sm:$0xff]
    %v663 = vld [vmem:[%s12 + $0x88] sm:$0xff]
    %v664 = vld [vmem:[%s12 + $0x90] sm:$0xff]
    %v665 = vld [vmem:[%s12 + $0x98] sm:$0xff]
    %v666 = vld [vmem:[%s12 + $0xa0] sm:$0xff]
    %v667 = vld [vmem:[%s12 + $0xa8] sm:$0xff]
    %v668 = vld [vmem:[%s12 + $0xb0] sm:$0xff]
    %v669 = vld [vmem:[%s12 + $0xb8] sm:$0xff]
    %v670 = vld [vmem:[%s12 + $0xc0] sm:$0xff]
    %v671 = vld [vmem:[%s12 + $0xc8] sm:$0xff]
    %v672 = vld [vmem:[%s12 + $0xd0] sm:$0xff]
    %v673 = vld [vmem:[%s12 + $0xd8] sm:$0xff]
    %v674 = vld [vmem:[%s12 + $0xe0] sm:$0xff]
    %v675 = vld [vmem:[%s12 + $0xe8] sm:$0xff]
    %v676 = vld [vmem:[%s12 + $0xf0] sm:$0xff]
    %v677 = vld [vmem:[%s12 + $0xf8] sm:$0xff]
    %v678 = vld [vmem:[%s13] sm:$0x3]
    %v680 = vperm.slane %v678, 0
    %v681 = vperm.slane %v678, 1
    %684 = vmatpush.msra.mxu0 %v676
    %685 = vmatpush.msra.mxu0 %v674
    %686 = vmatpush.msra.mxu0 %v672
    %687 = vmatpush.msra.mxu0 %v670
    %688 = vmatpush.msra.mxu0 %v668
    %689 = vmatpush.msra.mxu0 %v666
    %690 = vmatpush.msra.mxu0 %v664
    %691 = vmatpush.msra.mxu0 %v662
    %692 = vmatpush.msra.mxu0 %v660
    %693 = vmatpush.msra.mxu0 %v658
    %694 = vmatpush.msra.mxu0 %v656
    %695 = vmatpush.msra.mxu0 %v654
    %696 = vmatpush.msra.mxu0 %v652
    %697 = vmatpush.msra.mxu0 %v650
    %698 = vmatpush.msra.mxu0 %v648
    %699 = vmatpush.msra.mxu0 %v646
    %700 = vmatmul.f32.gmra.mxu0 %v644
    %v701 = vpop.f32.mrf.mxu0
    %v702 = vadd.f32 %v680, %v701
    %703 = vmatmul.f32.gmra.mxu0 %v645
    %v704 = vpop.f32.mrf.mxu0
    %v705 = vadd.f32 %v680, %v704
    %706 = vdwg.mxu0
    %707 = vmatpush.msra.mxu0 %v677
    %708 = vmatpush.msra.mxu0 %v675
    %709 = vmatpush.msra.mxu0 %v673
    %710 = vmatpush.msra.mxu0 %v671
    %711 = vmatpush.msra.mxu0 %v669
    %712 = vmatpush.msra.mxu0 %v667
    %713 = vmatpush.msra.mxu0 %v665
    %714 = vmatpush.msra.mxu0 %v663
    %715 = vmatpush.msra.mxu0 %v661
    %716 = vmatpush.msra.mxu0 %v659
    %717 = vmatpush.msra.mxu0 %v657
    %718 = vmatpush.msra.mxu0 %v655
    %719 = vmatpush.msra.mxu0 %v653
    %720 = vmatpush.msra.mxu0 %v651
    %721 = vmatpush.msra.mxu0 %v649
    %722 = vmatpush.msra.mxu0 %v647
    %723 = vmatmul.f32.gmra.mxu0 %v644
    %v724 = vpop.f32.mrf.mxu0
    %v725 = vadd.f32 %v681, %v724
    %726 = vmatmul.f32.gmra.mxu0 %v645
    %v727 = vpop.f32.mrf.mxu0
    %v728 = vadd.f32 %v681, %v727
    %729 = vdwg.mxu0
    %v730 = vmax.f32 %v702, 0.0
    %v731 = vmax.f32 %v725, 0.0
    %v732 = vmax.f32 %v705, 0.0
    %v733 = vmax.f32 %v728, 0.0
    %v734 = vld [vmem:[#allocation7] sm:$0xff]
    %v735 = vld [vmem:[#allocation7 + $0x8] sm:$0xff]
    %v736 = vld [vmem:[#allocation7 + $0x10] sm:$0xff]
    %v737 = vld [vmem:[#allocation7 + $0x18] sm:$0xff]
    %v738 = vld [vmem:[#allocation7 + $0x20] sm:$0xff]
    %v739 = vld [vmem:[#allocation7 + $0x28] sm:$0xff]
    %v740 = vld [vmem:[#allocation7 + $0x30] sm:$0xff]
    %v741 = vld [vmem:[#allocation7 + $0x38] sm:$0xff]
    %v742 = vld [vmem:[#allocation7 + $0x40] sm:$0xff]
    %v743 = vld [vmem:[#allocation7 + $0x48] sm:$0xff]
    %v744 = vld [vmem:[#allocation7 + $0x50] sm:$0xff]
    %v745 = vld [vmem:[#allocation7 + $0x58] sm:$0xff]
    %v746 = vld [vmem:[#allocation7 + $0x60] sm:$0xff]
    %v747 = vld [vmem:[#allocation7 + $0x68] sm:$0xff]
    %v748 = vld [vmem:[#allocation7 + $0x70] sm:$0xff]
    %v749 = vld [vmem:[#allocation7 + $0x78] sm:$0xff]
    %v750 = vld [vmem:[#allocation7 + $0x80] sm:$0xff]
    %v751 = vld [vmem:[#allocation7 + $0x88] sm:$0xff]
    %v752 = vld [vmem:[#allocation7 + $0x90] sm:$0xff]
    %v753 = vld [vmem:[#allocation7 + $0x98] sm:$0xff]
    %v754 = vld [vmem:[#allocation7 + $0xa0] sm:$0xff]
    %v755 = vld [vmem:[#allocation7 + $0xa8] sm:$0xff]
    %v756 = vld [vmem:[#allocation7 + $0xb0] sm:$0xff]
    %v757 = vld [vmem:[#allocation7 + $0xb8] sm:$0xff]
    %v758 = vld [vmem:[#allocation7 + $0xc0] sm:$0xff]
    %v759 = vld [vmem:[#allocation7 + $0xc8] sm:$0xff]
    %v760 = vld [vmem:[#allocation7 + $0xd0] sm:$0xff]
    %v761 = vld [vmem:[#allocation7 + $0xd8] sm:$0xff]
    %v762 = vld [vmem:[#allocation7 + $0xe0] sm:$0xff]
    %v763 = vld [vmem:[#allocation7 + $0xe8] sm:$0xff]
    %v764 = vld [vmem:[#allocation7 + $0xf0] sm:$0xff]
    %v765 = vld [vmem:[#allocation7 + $0xf8] sm:$0xff]
    %v766 = vld [vmem:[%s15] sm:$0x1]
    %v768 = vperm.slane %v766, 0
    %770 = vmatpush.msra.mxu0 %v749
    %771 = vmatpush.msra.mxu0 %v748
    %772 = vmatpush.msra.mxu0 %v747
    %773 = vmatpush.msra.mxu0 %v746
    %774 = vmatpush.msra.mxu0 %v745
    %775 = vmatpush.msra.mxu0 %v744
    %776 = vmatpush.msra.mxu0 %v743
    %777 = vmatpush.msra.mxu0 %v742
    %778 = vmatpush.msra.mxu0 %v741
    %779 = vmatpush.msra.mxu0 %v740
    %780 = vmatpush.msra.mxu0 %v739
    %781 = vmatpush.msra.mxu0 %v738
    %782 = vmatpush.msra.mxu0 %v737
    %783 = vmatpush.msra.mxu0 %v736
    %784 = vmatpush.msra.mxu0 %v735
    %785 = vmatpush.msra.mxu0 %v734
    %786 = vmatmul.f32.gmra.mxu0 %v730
    %v787 = vpop.f32.mrf.mxu0
    %v788 = vadd.f32 %v768, %v787
    %789 = vmatmul.f32.gmra.mxu0 %v732
    %v790 = vpop.f32.mrf.mxu0
    %v791 = vadd.f32 %v768, %v790
    %792 = vdwg.mxu0
    %793 = vmatpush.msra.mxu0 %v765
    %794 = vmatpush.msra.mxu0 %v764
    %795 = vmatpush.msra.mxu0 %v763
    %796 = vmatpush.msra.mxu0 %v762
    %797 = vmatpush.msra.mxu0 %v761
    %798 = vmatpush.msra.mxu0 %v760
    %799 = vmatpush.msra.mxu0 %v759
    %800 = vmatpush.msra.mxu0 %v758
    %801 = vmatpush.msra.mxu0 %v757
    %802 = vmatpush.msra.mxu0 %v756
    %803 = vmatpush.msra.mxu0 %v755
    %804 = vmatpush.msra.mxu0 %v754
    %805 = vmatpush.msra.mxu0 %v753
    %806 = vmatpush.msra.mxu0 %v752
    %807 = vmatpush.msra.mxu0 %v751
    %808 = vmatpush.msra.mxu0 %v750
    %809 = vmatmul.f32.gmra.mxu0 %v731
    %v810 = vpop.f32.mrf.mxu0
    %v811 = vadd.f32 %v788, %v810
    %812 = vmatmul.f32.gmra.mxu0 %v733
    %v813 = vpop.f32.mrf.mxu0
    %v814 = vadd.f32 %v791, %v813
    %815 = vdwg.mxu0
    %v816 = vadd.f32 %v644, %v811
    %v817 = vadd.f32 %v645, %v814
    %v818 = vld [vmem:[%s16] sm:$0x1]
    %v819 = vld [vmem:[%s17] sm:$0x1]
    %820 = vadd.xlane.f32.xlu0 %v816
    %v821 = vpop.xlane.xlu0 %820
    %822 = vadd.xlane.f32.xlu0 %v817
    %v823 = vpop.xlane.xlu0 %822
    %v824 = vmul.f32 %v821, 0.011363637
    %v825 = vmul.f32 %v823, 0.011363637
    %v826 = vsub.f32 %v816, %v824
    %v827 = vsub.f32 %v817, %v825
    %v828 = vmul.f32 %v826, %v600
    %v829 = vmul.f32 %v827, %v600
    %v830 = vmul.f32 %v828, %v828
    %v831 = vmul.f32 %v829, %v829
    %832 = vadd.xlane.f32.xlu0 %v830
    %v833 = vpop.xlane.xlu0 %832
    %834 = vadd.xlane.f32.xlu0 %v831
    %v835 = vpop.xlane.xlu0 %834
    %v836 = vmul.f32 %v833, 0.011363637
    %v837 = vmul.f32 %v835, 0.011363637
    %v838 = vadd.f32 %v836, 1e-05
    %v839 = vadd.f32 %v837, 1e-05
    %v840 = vrsqrt.pop %v838
    %v841 = vmul.f32 %v840, %v838
    %v842 = vmul.f32 %v841, %v840
    %v843 = vmul.f32 0.5, %v842
    %v844 = vsub.f32 1.5, %v843
    %v845 = vmul.f32 %v840, %v844
    %vm846 = vweird.f32 %v838
    %vm847 = vweird.f32 %v840
    %vm848 = vmor %vm846, %vm847
    %v849 = vsel %vm848, %v840, %v845
    %v850 = vrsqrt.pop %v839
    %v851 = vmul.f32 %v850, %v839
    %v852 = vmul.f32 %v851, %v850
    %v853 = vmul.f32 0.5, %v852
    %v854 = vsub.f32 1.5, %v853
    %v855 = vmul.f32 %v850, %v854
    %vm856 = vweird.f32 %v839
    %vm857 = vweird.f32 %v850
    %vm858 = vmor %vm856, %vm857
    %v859 = vsel %vm858, %v850, %v855
    %v860 = vmul.f32 %v828, %v849
    %v861 = vmul.f32 %v829, %v859
    %v863 = vperm.slane %v818, 0
    %v865 = vmul.f32 %v860, %v863
    %v866 = vmul.f32 %v861, %v863
    %v868 = vperm.slane %v819, 0
    %v870 = vadd.f32 %v865, %v868
    %v871 = vadd.f32 %v866, %v868
    %s872 = scalar_lea.vmem [#allocation3], 384
    %v873 = vld [vmem:[%s872] sm:$0xff]
    %v874 = vld [vmem:[%s872 + $0x8] sm:$0xff]
    %v875 = vld [vmem:[%s872 + $0x10] sm:$0xff]
    %v876 = vld [vmem:[%s872 + $0x18] sm:$0xff]
    %v877 = vld [vmem:[%s872 + $0x20] sm:$0xff]
    %v878 = vld [vmem:[%s872 + $0x28] sm:$0xff]
    %v879 = vld [vmem:[%s872 + $0x30] sm:$0xff]
    %v880 = vld [vmem:[%s872 + $0x38] sm:$0xff]
    %v881 = vld [vmem:[%s872 + $0x40] sm:$0xff]
    %v882 = vld [vmem:[%s872 + $0x48] sm:$0xff]
    %v883 = vld [vmem:[%s872 + $0x50] sm:$0xff]
    %v884 = vld [vmem:[%s872 + $0x58] sm:$0xff]
    %v885 = vld [vmem:[%s872 + $0x60] sm:$0xff]
    %v886 = vld [vmem:[%s872 + $0x68] sm:$0xff]
    %v887 = vld [vmem:[%s872 + $0x70] sm:$0xff]
    %v888 = vld [vmem:[%s872 + $0x78] sm:$0xff]
    %v889 = vld [vmem:[%s872 + $0x80] sm:$0xff]
    %v890 = vld [vmem:[%s872 + $0x88] sm:$0xff]
    %v891 = vld [vmem:[%s872 + $0x90] sm:$0xff]
    %v892 = vld [vmem:[%s872 + $0x98] sm:$0xff]
    %v893 = vld [vmem:[%s872 + $0xa0] sm:$0xff]
    %v894 = vld [vmem:[%s872 + $0xa8] sm:$0xff]
    %v895 = vld [vmem:[%s872 + $0xb0] sm:$0xff]
    %v896 = vld [vmem:[%s872 + $0xb8] sm:$0xff]
    %v897 = vld [vmem:[%s872 + $0xc0] sm:$0xff]
    %v898 = vld [vmem:[%s872 + $0xc8] sm:$0xff]
    %v899 = vld [vmem:[%s872 + $0xd0] sm:$0xff]
    %v900 = vld [vmem:[%s872 + $0xd8] sm:$0xff]
    %v901 = vld [vmem:[%s872 + $0xe0] sm:$0xff]
    %v902 = vld [vmem:[%s872 + $0xe8] sm:$0xff]
    %v903 = vld [vmem:[%s872 + $0xf0] sm:$0xff]
    %v904 = vld [vmem:[%s872 + $0xf8] sm:$0xff]
    %v905 = vld [vmem:[%s872 + $0x100] sm:$0xff]
    %v906 = vld [vmem:[%s872 + $0x108] sm:$0xff]
    %v907 = vld [vmem:[%s872 + $0x110] sm:$0xff]
    %v908 = vld [vmem:[%s872 + $0x118] sm:$0xff]
    %v909 = vld [vmem:[%s872 + $0x120] sm:$0xff]
    %v910 = vld [vmem:[%s872 + $0x128] sm:$0xff]
    %v911 = vld [vmem:[%s872 + $0x130] sm:$0xff]
    %v912 = vld [vmem:[%s872 + $0x138] sm:$0xff]
    %v913 = vld [vmem:[%s872 + $0x140] sm:$0xff]
    %v914 = vld [vmem:[%s872 + $0x148] sm:$0xff]
    %v915 = vld [vmem:[%s872 + $0x150] sm:$0xff]
    %v916 = vld [vmem:[%s872 + $0x158] sm:$0xff]
    %v917 = vld [vmem:[%s872 + $0x160] sm:$0xff]
    %v918 = vld [vmem:[%s872 + $0x168] sm:$0xff]
    %v919 = vld [vmem:[%s872 + $0x170] sm:$0xff]
    %v920 = vld [vmem:[%s872 + $0x178] sm:$0xff]
    %s921 = scalar_lea.vmem %s7, 3
    %v922 = vld [vmem:[%s921] sm:$0x7]
    %v924 = vperm.slane %v922, 0
    %v925 = vperm.slane %v922, 1
    %v926 = vperm.slane %v922, 2
    %930 = vmatpush.msra.mxu0 %v918
    %931 = vmatpush.msra.mxu0 %v915
    %932 = vmatpush.msra.mxu0 %v912
    %933 = vmatpush.msra.mxu0 %v909
    %934 = vmatpush.msra.mxu0 %v906
    %935 = vmatpush.msra.mxu0 %v903
    %936 = vmatpush.msra.mxu0 %v900
    %937 = vmatpush.msra.mxu0 %v897
    %938 = vmatpush.msra.mxu0 %v894
    %939 = vmatpush.msra.mxu0 %v891
    %940 = vmatpush.msra.mxu0 %v888
    %941 = vmatpush.msra.mxu0 %v885
    %942 = vmatpush.msra.mxu0 %v882
    %943 = vmatpush.msra.mxu0 %v879
    %944 = vmatpush.msra.mxu0 %v876
    %945 = vmatpush.msra.mxu0 %v873
    %946 = vmatmul.f32.gmra.mxu0 %v870
    %v947 = vpop.f32.mrf.mxu0
    %v948 = vadd.f32 %v924, %v947
    %949 = vmatmul.f32.gmra.mxu0 %v871
    %v950 = vpop.f32.mrf.mxu0
    %v951 = vadd.f32 %v924, %v950
    %952 = vdwg.mxu0
    %953 = vmatpush.msra.mxu0 %v919
    %954 = vmatpush.msra.mxu0 %v916
    %955 = vmatpush.msra.mxu0 %v913
    %956 = vmatpush.msra.mxu0 %v910
    %957 = vmatpush.msra.mxu0 %v907
    %958 = vmatpush.msra.mxu0 %v904
    %959 = vmatpush.msra.mxu0 %v901
    %960 = vmatpush.msra.mxu0 %v898
    %961 = vmatpush.msra.mxu0 %v895
    %962 = vmatpush.msra.mxu0 %v892
    %963 = vmatpush.msra.mxu0 %v889
    %964 = vmatpush.msra.mxu0 %v886
    %965 = vmatpush.msra.mxu0 %v883
    %966 = vmatpush.msra.mxu0 %v880
    %967 = vmatpush.msra.mxu0 %v877
    %968 = vmatpush.msra.mxu0 %v874
    %969 = vmatmul.f32.gmra.mxu0 %v870
    %v970 = vpop.f32.mrf.mxu0
    %v971 = vadd.f32 %v925, %v970
    %972 = vmatmul.f32.gmra.mxu0 %v871
    %v973 = vpop.f32.mrf.mxu0
    %v974 = vadd.f32 %v925, %v973
    %975 = vdwg.mxu0
    %976 = vmatpush.msra.mxu0 %v920
    %977 = vmatpush.msra.mxu0 %v917
    %978 = vmatpush.msra.mxu0 %v914
    %979 = vmatpush.msra.mxu0 %v911
    %980 = vmatpush.msra.mxu0 %v908
    %981 = vmatpush.msra.mxu0 %v905
    %982 = vmatpush.msra.mxu0 %v902
    %983 = vmatpush.msra.mxu0 %v899
    %984 = vmatpush.msra.mxu0 %v896
    %985 = vmatpush.msra.mxu0 %v893
    %986 = vmatpush.msra.mxu0 %v890
    %987 = vmatpush.msra.mxu0 %v887
    %988 = vmatpush.msra.mxu0 %v884
    %989 = vmatpush.msra.mxu0 %v881
    %990 = vmatpush.msra.mxu0 %v878
    %991 = vmatpush.msra.mxu0 %v875
    %992 = vmatmul.f32.gmra.mxu0 %v870
    %v993 = vpop.f32.mrf.mxu0
    %v994 = vadd.f32 %v926, %v993
    %995 = vmatmul.f32.gmra.mxu0 %v871
    %v996 = vpop.f32.mrf.mxu0
    %v997 = vadd.f32 %v926, %v996
    %998 = vdwg.mxu0
    %999 = vmatpush.msra.mxu0 0.0
    %1000 = vmatpush.msra.mxu0 0.0
    %1001 = vmatpush.msra.mxu0 0.0
    %1002 = vmatpush.msra.mxu0 0.0
    %1003 = vmatpush.msra.mxu0 0.0
    %1004 = vmatpush.msra.mxu0 0.0
    %1005 = vmatpush.msra.mxu0 0.0
    %1006 = vmatpush.msra.mxu0 0.0
    %1007 = vmatpush.msra.mxu0 0.0
    %1008 = vmatpush.msra.mxu0 0.0
    %1009 = vmatpush.msra.mxu0 0.0
    %1010 = vmatpush.msra.mxu0 0.0
    %1011 = vmatpush.msra.mxu0 0.0
    %1012 = vmatpush.msra.mxu0 0.0
    %1013 = vmatpush.msra.mxu0 %v974
    %1014 = vmatpush.msra.mxu0 %v971
    %1015 = vmatmul.f32.gmra.mxu0 %v269
    %v1016 = vpop.f32.mrf.mxu0
    %v1017 = vadd.f32 0.0, %v1016
    %1018 = vmatmul.f32.gmra.mxu0 %v272
    %v1019 = vpop.f32.mrf.mxu0
    %v1020 = vadd.f32 0.0, %v1019
    %1021 = vdwg.mxu0
    %1022 = vmatpush.msra.mxu0 0.0
    %1023 = vmatpush.msra.mxu0 0.0
    %1024 = vmatpush.msra.mxu0 0.0
    %1025 = vmatpush.msra.mxu0 0.0
    %1026 = vmatpush.msra.mxu0 0.0
    %1027 = vmatpush.msra.mxu0 0.0
    %1028 = vmatpush.msra.mxu0 0.0
    %1029 = vmatpush.msra.mxu0 0.0
    %1030 = vmatpush.msra.mxu0 0.0
    %1031 = vmatpush.msra.mxu0 0.0
    %1032 = vmatpush.msra.mxu0 0.0
    %1033 = vmatpush.msra.mxu0 0.0
    %1034 = vmatpush.msra.mxu0 0.0
    %1035 = vmatpush.msra.mxu0 0.0
    %1036 = vmatpush.msra.mxu0 %v997
    %1037 = vmatpush.msra.mxu0 %v994
    %1038 = vmatmul.f32.gmra.mxu0 %v269
    %v1039 = vpop.f32.mrf.mxu0
    %v1040 = vadd.f32 0.0, %v1039
    %1041 = vmatmul.f32.gmra.mxu0 %v272
    %v1042 = vpop.f32.mrf.mxu0
    %v1043 = vadd.f32 0.0, %v1042
    %1044 = vdwg.mxu0
    %v1045 = vmul.f32 %v948, %v1017
    %v1046 = vmul.f32 %v951, %v1020
    %1047 = vmatpush.msra.mxu0 %v135
    %1048 = vmatpush.msra.mxu0 %v134
    %1049 = vmatpush.msra.mxu0 %v133
    %1050 = vmatpush.msra.mxu0 %v132
    %1051 = vmatpush.msra.mxu0 %v131
    %1052 = vmatpush.msra.mxu0 %v130
    %1053 = vmatpush.msra.mxu0 %v129
    %1054 = vmatpush.msra.mxu0 %v128
    %1055 = vmatpush.msra.mxu0 %v127
    %1056 = vmatpush.msra.mxu0 %v126
    %1057 = vmatpush.msra.mxu0 %v125
    %1058 = vmatpush.msra.mxu0 %v124
    %1059 = vmatpush.msra.mxu0 %v123
    %1060 = vmatpush.msra.mxu0 %v122
    %1061 = vmatpush.msra.mxu0 %v121
    %1062 = vmatpush.msra.mxu0 %v120
    %1063 = vmatmul.f32.gmra.mxu0 %v1045
    %v1064 = vpop.f32.mrf.mxu0
    %v1065 = vadd.f32 0.0, %v1064
    %1066 = vmatmul.f32.gmra.mxu0 %v1046
    %v1067 = vpop.f32.mrf.mxu0
    %v1068 = vadd.f32 0.0, %v1067
    %1069 = vdwg.mxu0
    %1070 = vmatpush.msra.mxu0 0.0
    %1071 = vmatpush.msra.mxu0 0.0
    %1072 = vmatpush.msra.mxu0 0.0
    %1073 = vmatpush.msra.mxu0 0.0
    %1074 = vmatpush.msra.mxu0 0.0
    %1075 = vmatpush.msra.mxu0 0.0
    %1076 = vmatpush.msra.mxu0 0.0
    %1077 = vmatpush.msra.mxu0 0.0
    %1078 = vmatpush.msra.mxu0 0.0
    %1079 = vmatpush.msra.mxu0 0.0
    %1080 = vmatpush.msra.mxu0 0.0
    %1081 = vmatpush.msra.mxu0 0.0
    %1082 = vmatpush.msra.mxu0 0.0
    %1083 = vmatpush.msra.mxu0 0.0
    %1084 = vmatpush.msra.mxu0 %v974
    %1085 = vmatpush.msra.mxu0 %v971
    %1086 = vmatmul.f32.gmra.mxu0 %v349
    %v1087 = vpop.f32.mrf.mxu0
    %v1088 = vadd.f32 0.0, %v1087
    %1089 = vmatmul.f32.gmra.mxu0 %v352
    %v1090 = vpop.f32.mrf.mxu0
    %v1091 = vadd.f32 0.0, %v1090
    %1092 = vdwg.mxu0
    %1093 = vmatpush.msra.mxu0 0.0
    %1094 = vmatpush.msra.mxu0 0.0
    %1095 = vmatpush.msra.mxu0 0.0
    %1096 = vmatpush.msra.mxu0 0.0
    %1097 = vmatpush.msra.mxu0 0.0
    %1098 = vmatpush.msra.mxu0 0.0
    %1099 = vmatpush.msra.mxu0 0.0
    %1100 = vmatpush.msra.mxu0 0.0
    %1101 = vmatpush.msra.mxu0 0.0
    %1102 = vmatpush.msra.mxu0 0.0
    %1103 = vmatpush.msra.mxu0 0.0
    %1104 = vmatpush.msra.mxu0 0.0
    %1105 = vmatpush.msra.mxu0 0.0
    %1106 = vmatpush.msra.mxu0 0.0
    %1107 = vmatpush.msra.mxu0 %v997
    %1108 = vmatpush.msra.mxu0 %v994
    %1109 = vmatmul.f32.gmra.mxu0 %v349
    %v1110 = vpop.f32.mrf.mxu0
    %v1111 = vadd.f32 0.0, %v1110
    %1112 = vmatmul.f32.gmra.mxu0 %v352
    %v1113 = vpop.f32.mrf.mxu0
    %v1114 = vadd.f32 0.0, %v1113
    %1115 = vdwg.mxu0
    %v1116 = vmul.f32 %v948, %v1088
    %v1117 = vmul.f32 %v951, %v1091
    %1118 = vmatpush.msra.mxu0 %v135
    %1119 = vmatpush.msra.mxu0 %v134
    %1120 = vmatpush.msra.mxu0 %v133
    %1121 = vmatpush.msra.mxu0 %v132
    %1122 = vmatpush.msra.mxu0 %v131
    %1123 = vmatpush.msra.mxu0 %v130
    %1124 = vmatpush.msra.mxu0 %v129
    %1125 = vmatpush.msra.mxu0 %v128
    %1126 = vmatpush.msra.mxu0 %v127
    %1127 = vmatpush.msra.mxu0 %v126
    %1128 = vmatpush.msra.mxu0 %v125
    %1129 = vmatpush.msra.mxu0 %v124
    %1130 = vmatpush.msra.mxu0 %v123
    %1131 = vmatpush.msra.mxu0 %v122
    %1132 = vmatpush.msra.mxu0 %v121
    %1133 = vmatpush.msra.mxu0 %v120
    %1134 = vmatmul.f32.gmra.mxu0 %v1116
    %v1135 = vpop.f32.mrf.mxu0
    %v1136 = vadd.f32 0.0, %v1135
    %1137 = vmatmul.f32.gmra.mxu0 %v1117
    %v1138 = vpop.f32.mrf.mxu0
    %v1139 = vadd.f32 0.0, %v1138
    %1140 = vdwg.mxu0
    %v1141 = vmax.f32 %v1065, %v1136
    %v1142 = vmax.f32 %v1068, %v1139
    %v1143 = vsub.f32 %v1065, %v1141
    %v1144 = vsub.f32 %v1068, %v1142
    %v1145 = vmul.f32 %v1143, 1.442695
    %v1146 = vpow.pop %v1145
    %v1147 = vmul.f32 %v1144, 1.442695
    %v1148 = vpow.pop %v1147
    %v1149 = vsub.f32 %v1136, %v1141
    %v1150 = vsub.f32 %v1139, %v1142
    %v1151 = vmul.f32 %v1149, 1.442695
    %v1152 = vpow.pop %v1151
    %v1153 = vmul.f32 %v1150, 1.442695
    %v1154 = vpow.pop %v1153
    %v1155 = vadd.f32 %v1146, %v1152
    %v1156 = vadd.f32 %v1148, %v1154
    %v1157 = vrcp.pop %v1155
    %v1158 = vmul.f32 %v1155, %v1157
    %v1159 = vsub.f32 1.0, %v1158
    %v1160 = vmul.f32 %v1157, %v1159
    %v1161 = vadd.f32 %v1157, %v1160
    %vm1162 = vweird.f32 %v1155
    %vm1163 = vweird.f32 %v1157
    %vm1164 = vmor %vm1162, %vm1163
    %v1165 = vsel %vm1164, %v1157, %v1161
    %v1166 = vand.u32 2147483647, %v1155
    %vm1167 = vcmp.eq.f32.partialorder %v1166, 8.507059e+37
    %v1168 = vand.u32 %v1155, 2147483648
    %v1169 = vor.u32 1.1754944e-38, %v1168
    %v1170 = vsel %vm1167, %v1169, %v1165
    %v1171 = vmul.f32 1.0, %v1170
    %v1172 = vrcp.pop %v1156
    %v1173 = vmul.f32 %v1156, %v1172
    %v1174 = vsub.f32 1.0, %v1173
    %v1175 = vmul.f32 %v1172, %v1174
    %v1176 = vadd.f32 %v1172, %v1175
    %vm1177 = vweird.f32 %v1156
    %vm1178 = vweird.f32 %v1172
    %vm1179 = vmor %vm1177, %vm1178
    %v1180 = vsel %vm1179, %v1172, %v1176
    %v1181 = vand.u32 2147483647, %v1156
    %vm1182 = vcmp.eq.f32.partialorder %v1181, 8.507059e+37
    %v1183 = vand.u32 %v1156, 2147483648
    %v1184 = vor.u32 1.1754944e-38, %v1183
    %v1185 = vsel %vm1182, %v1184, %v1180
    %v1186 = vmul.f32 1.0, %v1185
    %v1187 = vmul.f32 %v1146, %v1171
    %v1188 = vmul.f32 %v1148, %v1186
    %v1190 = vsel %vm473, %v1187, 0
    %v1193 = vsel %vm473, %v1188, 0
    %1195 = vmatpush.msra.mxu0 0.0
    %1196 = vmatpush.msra.mxu0 0.0
    %1197 = vmatpush.msra.mxu0 0.0
    %1198 = vmatpush.msra.mxu0 0.0
    %1199 = vmatpush.msra.mxu0 0.0
    %1200 = vmatpush.msra.mxu0 0.0
    %1201 = vmatpush.msra.mxu0 0.0
    %1202 = vmatpush.msra.mxu0 0.0
    %1203 = vmatpush.msra.mxu0 0.0
    %1204 = vmatpush.msra.mxu0 0.0
    %1205 = vmatpush.msra.mxu0 0.0
    %1206 = vmatpush.msra.mxu0 0.0
    %1207 = vmatpush.msra.mxu0 0.0
    %1208 = vmatpush.msra.mxu0 0.0
    %1209 = vmatpush.msra.mxu0 0.0
    %1210 = vmatpush.msra.mxu0 %v482
    %1211 = vmatmul.f32.gmra.mxu0 %v1190
    %v1212 = vpop.f32.mrf.mxu0
    %v1213 = vadd.f32 0.0, %v1212
    %1214 = vmatmul.f32.gmra.mxu0 %v1193
    %v1215 = vpop.f32.mrf.mxu0
    %v1216 = vadd.f32 0.0, %v1215
    %1217 = vdwg.mxu0
    %v1218 = vmul.f32 %v1213, %v1040
    %v1219 = vmul.f32 %v1216, %v1043
    %v1220 = vmul.f32 %v1152, %v1171
    %v1221 = vmul.f32 %v1154, %v1186
    %v1223 = vsel %vm473, %v1220, 0
    %v1226 = vsel %vm473, %v1221, 0
    %1228 = vmatpush.msra.mxu0 0.0
    %1229 = vmatpush.msra.mxu0 0.0
    %1230 = vmatpush.msra.mxu0 0.0
    %1231 = vmatpush.msra.mxu0 0.0
    %1232 = vmatpush.msra.mxu0 0.0
    %1233 = vmatpush.msra.mxu0 0.0
    %1234 = vmatpush.msra.mxu0 0.0
    %1235 = vmatpush.msra.mxu0 0.0
    %1236 = vmatpush.msra.mxu0 0.0
    %1237 = vmatpush.msra.mxu0 0.0
    %1238 = vmatpush.msra.mxu0 0.0
    %1239 = vmatpush.msra.mxu0 0.0
    %1240 = vmatpush.msra.mxu0 0.0
    %1241 = vmatpush.msra.mxu0 0.0
    %1242 = vmatpush.msra.mxu0 0.0
    %1243 = vmatpush.msra.mxu0 %v482
    %1244 = vmatmul.f32.gmra.mxu0 %v1223
    %v1245 = vpop.f32.mrf.mxu0
    %v1246 = vadd.f32 0.0, %v1245
    %1247 = vmatmul.f32.gmra.mxu0 %v1226
    %v1248 = vpop.f32.mrf.mxu0
    %v1249 = vadd.f32 0.0, %v1248
    %1250 = vdwg.mxu0
    %v1251 = vmul.f32 %v1246, %v1111
    %v1252 = vmul.f32 %v1249, %v1114
    %v1253 = vadd.f32 %v1218, %v1251
    %v1254 = vadd.f32 %v1219, %v1252
    %s1255 = scalar_lea.vmem [#allocation5], 128
    %v1256 = vld [vmem:[%s1255] sm:$0xff]
    %v1257 = vld [vmem:[%s1255 + $0x8] sm:$0xff]
    %v1258 = vld [vmem:[%s1255 + $0x10] sm:$0xff]
    %v1259 = vld [vmem:[%s1255 + $0x18] sm:$0xff]
    %v1260 = vld [vmem:[%s1255 + $0x20] sm:$0xff]
    %v1261 = vld [vmem:[%s1255 + $0x28] sm:$0xff]
    %v1262 = vld [vmem:[%s1255 + $0x30] sm:$0xff]
    %v1263 = vld [vmem:[%s1255 + $0x38] sm:$0xff]
    %v1264 = vld [vmem:[%s1255 + $0x40] sm:$0xff]
    %v1265 = vld [vmem:[%s1255 + $0x48] sm:$0xff]
    %v1266 = vld [vmem:[%s1255 + $0x50] sm:$0xff]
    %v1267 = vld [vmem:[%s1255 + $0x58] sm:$0xff]
    %v1268 = vld [vmem:[%s1255 + $0x60] sm:$0xff]
    %v1269 = vld [vmem:[%s1255 + $0x68] sm:$0xff]
    %v1270 = vld [vmem:[%s1255 + $0x70] sm:$0xff]
    %v1271 = vld [vmem:[%s1255 + $0x78] sm:$0xff]
    %s1272 = scalar_lea.vmem %s9, 1
    %v1273 = vld [vmem:[%s1272] sm:$0x1]
    %v1275 = vperm.slane %v1273, 0
    %1277 = vmatpush.msra.mxu0 %v1271
    %1278 = vmatpush.msra.mxu0 %v1270
    %1279 = vmatpush.msra.mxu0 %v1269
    %1280 = vmatpush.msra.mxu0 %v1268
    %1281 = vmatpush.msra.mxu0 %v1267
    %1282 = vmatpush.msra.mxu0 %v1266
    %1283 = vmatpush.msra.mxu0 %v1265
    %1284 = vmatpush.msra.mxu0 %v1264
    %1285 = vmatpush.msra.mxu0 %v1263
    %1286 = vmatpush.msra.mxu0 %v1262
    %1287 = vmatpush.msra.mxu0 %v1261
    %1288 = vmatpush.msra.mxu0 %v1260
    %1289 = vmatpush.msra.mxu0 %v1259
    %1290 = vmatpush.msra.mxu0 %v1258
    %1291 = vmatpush.msra.mxu0 %v1257
    %1292 = vmatpush.msra.mxu0 %v1256
    %1293 = vmatmul.f32.gmra.mxu0 %v1253
    %v1294 = vpop.f32.mrf.mxu0
    %v1295 = vadd.f32 %v1275, %v1294
    %1296 = vmatmul.f32.gmra.mxu0 %v1254
    %v1297 = vpop.f32.mrf.mxu0
    %v1298 = vadd.f32 %v1275, %v1297
    %1299 = vdwg.mxu0
    %v1300 = vadd.f32 %v870, %v1295
    %v1301 = vadd.f32 %v871, %v1298
    %s1302 = scalar_lea.vmem %s10, 1
    %v1303 = vld [vmem:[%s1302] sm:$0x1]
    %s1304 = scalar_lea.vmem %s11, 1
    %v1305 = vld [vmem:[%s1304] sm:$0x1]
    %1306 = vadd.xlane.f32.xlu0 %v1300
    %v1307 = vpop.xlane.xlu0 %1306
    %1308 = vadd.xlane.f32.xlu0 %v1301
    %v1309 = vpop.xlane.xlu0 %1308
    %v1310 = vmul.f32 %v1307, 0.011363637
    %v1311 = vmul.f32 %v1309, 0.011363637
    %v1312 = vsub.f32 %v1300, %v1310
    %v1313 = vsub.f32 %v1301, %v1311
    %v1314 = vmul.f32 %v1312, %v600
    %v1315 = vmul.f32 %v1313, %v600
    %v1316 = vmul.f32 %v1314, %v1314
    %v1317 = vmul.f32 %v1315, %v1315
    %1318 = vadd.xlane.f32.xlu0 %v1316
    %v1319 = vpop.xlane.xlu0 %1318
    %1320 = vadd.xlane.f32.xlu0 %v1317
    %v1321 = vpop.xlane.xlu0 %1320
    %v1322 = vmul.f32 %v1319, 0.011363637
    %v1323 = vmul.f32 %v1321, 0.011363637
    %v1324 = vadd.f32 %v1322, 1e-05
    %v1325 = vadd.f32 %v1323, 1e-05
    %v1326 = vrsqrt.pop %v1324
    %v1327 = vmul.f32 %v1326, %v1324
    %v1328 = vmul.f32 %v1327, %v1326
    %v1329 = vmul.f32 0.5, %v1328
    %v1330 = vsub.f32 1.5, %v1329
    %v1331 = vmul.f32 %v1326, %v1330
    %vm1332 = vweird.f32 %v1324
    %vm1333 = vweird.f32 %v1326
    %vm1334 = vmor %vm1332, %vm1333
    %v1335 = vsel %vm1334, %v1326, %v1331
    %v1336 = vrsqrt.pop %v1325
    %v1337 = vmul.f32 %v1336, %v1325
    %v1338 = vmul.f32 %v1337, %v1336
    %v1339 = vmul.f32 0.5, %v1338
    %v1340 = vsub.f32 1.5, %v1339
    %v1341 = vmul.f32 %v1336, %v1340
    %vm1342 = vweird.f32 %v1325
    %vm1343 = vweird.f32 %v1336
    %vm1344 = vmor %vm1342, %vm1343
    %v1345 = vsel %vm1344, %v1336, %v1341
    %v1346 = vmul.f32 %v1314, %v1335
    %v1347 = vmul.f32 %v1315, %v1345
    %v1349 = vperm.slane %v1303, 0
    %v1351 = vmul.f32 %v1346, %v1349
    %v1352 = vmul.f32 %v1347, %v1349
    %v1354 = vperm.slane %v1305, 0
    %v1356 = vadd.f32 %v1351, %v1354
    %v1357 = vadd.f32 %v1352, %v1354
    %s1358 = scalar_lea.vmem %s12, 256
    %v1359 = vld [vmem:[%s1358] sm:$0xff]
    %v1360 = vld [vmem:[%s1358 + $0x8] sm:$0xff]
    %v1361 = vld [vmem:[%s1358 + $0x10] sm:$0xff]
    %v1362 = vld [vmem:[%s1358 + $0x18] sm:$0xff]
    %v1363 = vld [vmem:[%s1358 + $0x20] sm:$0xff]
    %v1364 = vld [vmem:[%s1358 + $0x28] sm:$0xff]
    %v1365 = vld [vmem:[%s1358 + $0x30] sm:$0xff]
    %v1366 = vld [vmem:[%s1358 + $0x38] sm:$0xff]
    %v1367 = vld [vmem:[%s1358 + $0x40] sm:$0xff]
    %v1368 = vld [vmem:[%s1358 + $0x48] sm:$0xff]
    %v1369 = vld [vmem:[%s1358 + $0x50] sm:$0xff]
    %v1370 = vld [vmem:[%s1358 + $0x58] sm:$0xff]
    %v1371 = vld [vmem:[%s1358 + $0x60] sm:$0xff]
    %v1372 = vld [vmem:[%s1358 + $0x68] sm:$0xff]
    %v1373 = vld [vmem:[%s1358 + $0x70] sm:$0xff]
    %v1374 = vld [vmem:[%s1358 + $0x78] sm:$0xff]
    %v1375 = vld [vmem:[%s1358 + $0x80] sm:$0xff]
    %v1376 = vld [vmem:[%s1358 + $0x88] sm:$0xff]
    %v1377 = vld [vmem:[%s1358 + $0x90] sm:$0xff]
    %v1378 = vld [vmem:[%s1358 + $0x98] sm:$0xff]
    %v1379 = vld [vmem:[%s1358 + $0xa0] sm:$0xff]
    %v1380 = vld [vmem:[%s1358 + $0xa8] sm:$0xff]
    %v1381 = vld [vmem:[%s1358 + $0xb0] sm:$0xff]
    %v1382 = vld [vmem:[%s1358 + $0xb8] sm:$0xff]
    %v1383 = vld [vmem:[%s1358 + $0xc0] sm:$0xff]
    %v1384 = vld [vmem:[%s1358 + $0xc8] sm:$0xff]
    %v1385 = vld [vmem:[%s1358 + $0xd0] sm:$0xff]
    %v1386 = vld [vmem:[%s1358 + $0xd8] sm:$0xff]
    %v1387 = vld [vmem:[%s1358 + $0xe0] sm:$0xff]
    %v1388 = vld [vmem:[%s1358 + $0xe8] sm:$0xff]
    %v1389 = vld [vmem:[%s1358 + $0xf0] sm:$0xff]
    %v1390 = vld [vmem:[%s1358 + $0xf8] sm:$0xff]
    %s1391 = scalar_lea.vmem %s13, 2
    %v1392 = vld [vmem:[%s1391] sm:$0x3]
    %v1394 = vperm.slane %v1392, 0
    %v1395 = vperm.slane %v1392, 1
    %1398 = vmatpush.msra.mxu0 %v1389
    %1399 = vmatpush.msra.mxu0 %v1387
    %1400 = vmatpush.msra.mxu0 %v1385
    %1401 = vmatpush.msra.mxu0 %v1383
    %1402 = vmatpush.msra.mxu0 %v1381
    %1403 = vmatpush.msra.mxu0 %v1379
    %1404 = vmatpush.msra.mxu0 %v1377
    %1405 = vmatpush.msra.mxu0 %v1375
    %1406 = vmatpush.msra.mxu0 %v1373
    %1407 = vmatpush.msra.mxu0 %v1371
    %1408 = vmatpush.msra.mxu0 %v1369
    %1409 = vmatpush.msra.mxu0 %v1367
    %1410 = vmatpush.msra.mxu0 %v1365
    %1411 = vmatpush.msra.mxu0 %v1363
    %1412 = vmatpush.msra.mxu0 %v1361
    %1413 = vmatpush.msra.mxu0 %v1359
    %1414 = vmatmul.f32.gmra.mxu0 %v1356
    %v1415 = vpop.f32.mrf.mxu0
    %v1416 = vadd.f32 %v1394, %v1415
    %1417 = vmatmul.f32.gmra.mxu0 %v1357
    %v1418 = vpop.f32.mrf.mxu0
    %v1419 = vadd.f32 %v1394, %v1418
    %1420 = vdwg.mxu0
    %1421 = vmatpush.msra.mxu0 %v1390
    %1422 = vmatpush.msra.mxu0 %v1388
    %1423 = vmatpush.msra.mxu0 %v1386
    %1424 = vmatpush.msra.mxu0 %v1384
    %1425 = vmatpush.msra.mxu0 %v1382
    %1426 = vmatpush.msra.mxu0 %v1380
    %1427 = vmatpush.msra.mxu0 %v1378
    %1428 = vmatpush.msra.mxu0 %v1376
    %1429 = vmatpush.msra.mxu0 %v1374
    %1430 = vmatpush.msra.mxu0 %v1372
    %1431 = vmatpush.msra.mxu0 %v1370
    %1432 = vmatpush.msra.mxu0 %v1368
    %1433 = vmatpush.msra.mxu0 %v1366
    %1434 = vmatpush.msra.mxu0 %v1364
    %1435 = vmatpush.msra.mxu0 %v1362
    %1436 = vmatpush.msra.mxu0 %v1360
    %1437 = vmatmul.f32.gmra.mxu0 %v1356
    %v1438 = vpop.f32.mrf.mxu0
    %v1439 = vadd.f32 %v1395, %v1438
    %1440 = vmatmul.f32.gmra.mxu0 %v1357
    %v1441 = vpop.f32.mrf.mxu0
    %v1442 = vadd.f32 %v1395, %v1441
    %1443 = vdwg.mxu0
    %v1444 = vmax.f32 %v1416, 0.0
    %v1445 = vmax.f32 %v1439, 0.0
    %v1446 = vmax.f32 %v1419, 0.0
    %v1447 = vmax.f32 %v1442, 0.0
    %s1448 = scalar_lea.vmem [#allocation7], 256
    %v1449 = vld [vmem:[%s1448] sm:$0xff]
    %v1450 = vld [vmem:[%s1448 + $0x8] sm:$0xff]
    %v1451 = vld [vmem:[%s1448 + $0x10] sm:$0xff]
    %v1452 = vld [vmem:[%s1448 + $0x18] sm:$0xff]
    %v1453 = vld [vmem:[%s1448 + $0x20] sm:$0xff]
    %v1454 = vld [vmem:[%s1448 + $0x28] sm:$0xff]
    %v1455 = vld [vmem:[%s1448 + $0x30] sm:$0xff]
    %v1456 = vld [vmem:[%s1448 + $0x38] sm:$0xff]
    %v1457 = vld [vmem:[%s1448 + $0x40] sm:$0xff]
    %v1458 = vld [vmem:[%s1448 + $0x48] sm:$0xff]
    %v1459 = vld [vmem:[%s1448 + $0x50] sm:$0xff]
    %v1460 = vld [vmem:[%s1448 + $0x58] sm:$0xff]
    %v1461 = vld [vmem:[%s1448 + $0x60] sm:$0xff]
    %v1462 = vld [vmem:[%s1448 + $0x68] sm:$0xff]
    %v1463 = vld [vmem:[%s1448 + $0x70] sm:$0xff]
    %v1464 = vld [vmem:[%s1448 + $0x78] sm:$0xff]
    %v1465 = vld [vmem:[%s1448 + $0x80] sm:$0xff]
    %v1466 = vld [vmem:[%s1448 + $0x88] sm:$0xff]
    %v1467 = vld [vmem:[%s1448 + $0x90] sm:$0xff]
    %v1468 = vld [vmem:[%s1448 + $0x98] sm:$0xff]
    %v1469 = vld [vmem:[%s1448 + $0xa0] sm:$0xff]
    %v1470 = vld [vmem:[%s1448 + $0xa8] sm:$0xff]
    %v1471 = vld [vmem:[%s1448 + $0xb0] sm:$0xff]
    %v1472 = vld [vmem:[%s1448 + $0xb8] sm:$0xff]
    %v1473 = vld [vmem:[%s1448 + $0xc0] sm:$0xff]
    %v1474 = vld [vmem:[%s1448 + $0xc8] sm:$0xff]
    %v1475 = vld [vmem:[%s1448 + $0xd0] sm:$0xff]
    %v1476 = vld [vmem:[%s1448 + $0xd8] sm:$0xff]
    %v1477 = vld [vmem:[%s1448 + $0xe0] sm:$0xff]
    %v1478 = vld [vmem:[%s1448 + $0xe8] sm:$0xff]
    %v1479 = vld [vmem:[%s1448 + $0xf0] sm:$0xff]
    %v1480 = vld [vmem:[%s1448 + $0xf8] sm:$0xff]
    %s1481 = scalar_lea.vmem %s15, 1
    %v1482 = vld [vmem:[%s1481] sm:$0x1]
    %v1484 = vperm.slane %v1482, 0
    %1486 = vmatpush.msra.mxu0 %v1464
    %1487 = vmatpush.msra.mxu0 %v1463
    %1488 = vmatpush.msra.mxu0 %v1462
    %1489 = vmatpush.msra.mxu0 %v1461
    %1490 = vmatpush.msra.mxu0 %v1460
    %1491 = vmatpush.msra.mxu0 %v1459
    %1492 = vmatpush.msra.mxu0 %v1458
    %1493 = vmatpush.msra.mxu0 %v1457
    %1494 = vmatpush.msra.mxu0 %v1456
    %1495 = vmatpush.msra.mxu0 %v1455
    %1496 = vmatpush.msra.mxu0 %v1454
    %1497 = vmatpush.msra.mxu0 %v1453
    %1498 = vmatpush.msra.mxu0 %v1452
    %1499 = vmatpush.msra.mxu0 %v1451
    %1500 = vmatpush.msra.mxu0 %v1450
    %1501 = vmatpush.msra.mxu0 %v1449
    %1502 = vmatmul.f32.gmra.mxu0 %v1444
    %v1503 = vpop.f32.mrf.mxu0
    %v1504 = vadd.f32 %v1484, %v1503
    %1505 = vmatmul.f32.gmra.mxu0 %v1446
    %v1506 = vpop.f32.mrf.mxu0
    %v1507 = vadd.f32 %v1484, %v1506
    %1508 = vdwg.mxu0
    %1509 = vmatpush.msra.mxu0 %v1480
    %1510 = vmatpush.msra.mxu0 %v1479
    %1511 = vmatpush.msra.mxu0 %v1478
    %1512 = vmatpush.msra.mxu0 %v1477
    %1513 = vmatpush.msra.mxu0 %v1476
    %1514 = vmatpush.msra.mxu0 %v1475
    %1515 = vmatpush.msra.mxu0 %v1474
    %1516 = vmatpush.msra.mxu0 %v1473
    %1517 = vmatpush.msra.mxu0 %v1472
    %1518 = vmatpush.msra.mxu0 %v1471
    %1519 = vmatpush.msra.mxu0 %v1470
    %1520 = vmatpush.msra.mxu0 %v1469
    %1521 = vmatpush.msra.mxu0 %v1468
    %1522 = vmatpush.msra.mxu0 %v1467
    %1523 = vmatpush.msra.mxu0 %v1466
    %1524 = vmatpush.msra.mxu0 %v1465
    %1525 = vmatmul.f32.gmra.mxu0 %v1445
    %v1526 = vpop.f32.mrf.mxu0
    %v1527 = vadd.f32 %v1504, %v1526
    %1528 = vmatmul.f32.gmra.mxu0 %v1447
    %v1529 = vpop.f32.mrf.mxu0
    %v1530 = vadd.f32 %v1507, %v1529
    %1531 = vdwg.mxu0
    %v1532 = vadd.f32 %v1356, %v1527
    %v1533 = vadd.f32 %v1357, %v1530
    %s1534 = scalar_lea.vmem %s16, 1
    %v1535 = vld [vmem:[%s1534] sm:$0x1]
    %s1536 = scalar_lea.vmem %s17, 1
    %v1537 = vld [vmem:[%s1536] sm:$0x1]
    %1538 = vadd.xlane.f32.xlu0 %v1532
    %v1539 = vpop.xlane.xlu0 %1538
    %1540 = vadd.xlane.f32.xlu0 %v1533
    %v1541 = vpop.xlane.xlu0 %1540
    %v1542 = vmul.f32 %v1539, 0.011363637
    %v1543 = vmul.f32 %v1541, 0.011363637
    %v1544 = vsub.f32 %v1532, %v1542
    %v1545 = vsub.f32 %v1533, %v1543
    %v1546 = vmul.f32 %v1544, %v600
    %v1547 = vmul.f32 %v1545, %v600
    %v1548 = vmul.f32 %v1546, %v1546
    %v1549 = vmul.f32 %v1547, %v1547
    %1550 = vadd.xlane.f32.xlu0 %v1548
    %v1551 = vpop.xlane.xlu0 %1550
    %1552 = vadd.xlane.f32.xlu0 %v1549
    %v1553 = vpop.xlane.xlu0 %1552
    %v1554 = vmul.f32 %v1551, 0.011363637
    %v1555 = vmul.f32 %v1553, 0.011363637
    %v1556 = vadd.f32 %v1554, 1e-05
    %v1557 = vadd.f32 %v1555, 1e-05
    %v1558 = vrsqrt.pop %v1556
    %v1559 = vmul.f32 %v1558, %v1556
    %v1560 = vmul.f32 %v1559, %v1558
    %v1561 = vmul.f32 0.5, %v1560
    %v1562 = vsub.f32 1.5, %v1561
    %v1563 = vmul.f32 %v1558, %v1562
    %vm1564 = vweird.f32 %v1556
    %vm1565 = vweird.f32 %v1558
    %vm1566 = vmor %vm1564, %vm1565
    %v1567 = vsel %vm1566, %v1558, %v1563
    %v1568 = vrsqrt.pop %v1557
    %v1569 = vmul.f32 %v1568, %v1557
    %v1570 = vmul.f32 %v1569, %v1568
    %v1571 = vmul.f32 0.5, %v1570
    %v1572 = vsub.f32 1.5, %v1571
    %v1573 = vmul.f32 %v1568, %v1572
    %vm1574 = vweird.f32 %v1557
    %vm1575 = vweird.f32 %v1568
    %vm1576 = vmor %vm1574, %vm1575
    %v1577 = vsel %vm1576, %v1568, %v1573
    %v1578 = vmul.f32 %v1546, %v1567
    %v1579 = vmul.f32 %v1547, %v1577
    %v1581 = vperm.slane %v1535, 0
    %v1583 = vmul.f32 %v1578, %v1581
    %v1584 = vmul.f32 %v1579, %v1581
    %v1586 = vperm.slane %v1537, 0
    %v1588 = vadd.f32 %v1583, %v1586
    %v1589 = vadd.f32 %v1584, %v1586
    %v1590 = vld [vmem:[%s18] sm:$0xff]
    %v1591 = vld [vmem:[%s18 + $0x8] sm:$0xff]
    %v1592 = vld [vmem:[%s18 + $0x10] sm:$0xff]
    %v1593 = vld [vmem:[%s18 + $0x18] sm:$0xff]
    %v1594 = vld [vmem:[%s18 + $0x20] sm:$0xff]
    %v1595 = vld [vmem:[%s18 + $0x28] sm:$0xff]
    %v1596 = vld [vmem:[%s18 + $0x30] sm:$0xff]
    %v1597 = vld [vmem:[%s18 + $0x38] sm:$0xff]
    %v1598 = vld [vmem:[%s18 + $0x40] sm:$0xff]
    %v1599 = vld [vmem:[%s18 + $0x48] sm:$0xff]
    %v1600 = vld [vmem:[%s18 + $0x50] sm:$0xff]
    %v1601 = vld [vmem:[%s18 + $0x58] sm:$0xff]
    %v1602 = vld [vmem:[%s18 + $0x60] sm:$0xff]
    %v1603 = vld [vmem:[%s18 + $0x68] sm:$0xff]
    %v1604 = vld [vmem:[%s18 + $0x70] sm:$0xff]
    %v1605 = vld [vmem:[%s18 + $0x78] sm:$0xff]
    %1606 = vmatpush.msra.mxu0 %v1605
    %1607 = vmatpush.msra.mxu0 %v1604
    %1608 = vmatpush.msra.mxu0 %v1603
    %1609 = vmatpush.msra.mxu0 %v1602
    %1610 = vmatpush.msra.mxu0 %v1601
    %1611 = vmatpush.msra.mxu0 %v1600
    %1612 = vmatpush.msra.mxu0 %v1599
    %1613 = vmatpush.msra.mxu0 %v1598
    %1614 = vmatpush.msra.mxu0 %v1597
    %1615 = vmatpush.msra.mxu0 %v1596
    %1616 = vmatpush.msra.mxu0 %v1595
    %1617 = vmatpush.msra.mxu0 %v1594
    %1618 = vmatpush.msra.mxu0 %v1593
    %1619 = vmatpush.msra.mxu0 %v1592
    %1620 = vmatpush.msra.mxu0 %v1591
    %1621 = vmatpush.msra.mxu0 %v1590
    %1622 = vmatmul.f32.gmra.mxu0 %v1588
    %v1623 = vpop.f32.mrf.mxu0
    %v1624 = vadd.f32 0.0, %v1623
    %1625 = vmatmul.f32.gmra.mxu0 %v1589
    %v1626 = vpop.f32.mrf.mxu0
    %v1627 = vadd.f32 0.0, %v1626
    %1628 = vdwg.mxu0
    %v1629 = vld [vmem:[%s5] sm:$0xff]
    %s1630 = scalar_lea.vmem %s18, 128
    %v1631 = vld [vmem:[%s1630] sm:$0xff]
    %v1632 = vld [vmem:[%s1630 + $0x8] sm:$0xff]
    %v1633 = vld [vmem:[%s1630 + $0x10] sm:$0xff]
    %v1634 = vld [vmem:[%s1630 + $0x18] sm:$0xff]
    %v1635 = vld [vmem:[%s1630 + $0x20] sm:$0xff]
    %v1636 = vld [vmem:[%s1630 + $0x28] sm:$0xff]
    %v1637 = vld [vmem:[%s1630 + $0x30] sm:$0xff]
    %v1638 = vld [vmem:[%s1630 + $0x38] sm:$0xff]
    %v1639 = vld [vmem:[%s1630 + $0x40] sm:$0xff]
    %v1640 = vld [vmem:[%s1630 + $0x48] sm:$0xff]
    %v1641 = vld [vmem:[%s1630 + $0x50] sm:$0xff]
    %v1642 = vld [vmem:[%s1630 + $0x58] sm:$0xff]
    %v1643 = vld [vmem:[%s1630 + $0x60] sm:$0xff]
    %v1644 = vld [vmem:[%s1630 + $0x68] sm:$0xff]
    %v1645 = vld [vmem:[%s1630 + $0x70] sm:$0xff]
    %v1646 = vld [vmem:[%s1630 + $0x78] sm:$0xff]
    %1647 = vmatpush.msra.mxu0 %v1646
    %1648 = vmatpush.msra.mxu0 %v1645
    %1649 = vmatpush.msra.mxu0 %v1644
    %1650 = vmatpush.msra.mxu0 %v1643
    %1651 = vmatpush.msra.mxu0 %v1642
    %1652 = vmatpush.msra.mxu0 %v1641
    %1653 = vmatpush.msra.mxu0 %v1640
    %1654 = vmatpush.msra.mxu0 %v1639
    %1655 = vmatpush.msra.mxu0 %v1638
    %1656 = vmatpush.msra.mxu0 %v1637
    %1657 = vmatpush.msra.mxu0 %v1636
    %1658 = vmatpush.msra.mxu0 %v1635
    %1659 = vmatpush.msra.mxu0 %v1634
    %1660 = vmatpush.msra.mxu0 %v1633
    %1661 = vmatpush.msra.mxu0 %v1632
    %1662 = vmatpush.msra.mxu0 %v1631
    %1663 = vmatmul.f32.gmra.mxu0 %v1588
    %v1664 = vpop.f32.mrf.mxu0
    %v1665 = vadd.f32 0.0, %v1664
    %1666 = vmatmul.f32.gmra.mxu0 %v1589
    %v1667 = vpop.f32.mrf.mxu0
    %v1668 = vadd.f32 0.0, %v1667
    %1669 = vdwg.mxu0
    %s1670 = scalar_lea.vmem %s5, 8
    %v1671 = vld [vmem:[%s1670] sm:$0xff]
    %v1673 = vsel %vm267, %v1671, 0
    %1675 = vmatpush.msra.mxu0 0.0
    %1676 = vmatpush.msra.mxu0 0.0
    %1677 = vmatpush.msra.mxu0 0.0
    %1678 = vmatpush.msra.mxu0 0.0
    %1679 = vmatpush.msra.mxu0 0.0
    %1680 = vmatpush.msra.mxu0 0.0
    %1681 = vmatpush.msra.mxu0 0.0
    %1682 = vmatpush.msra.mxu0 0.0
    %1683 = vmatpush.msra.mxu0 0.0
    %1684 = vmatpush.msra.mxu0 0.0
    %1685 = vmatpush.msra.mxu0 0.0
    %1686 = vmatpush.msra.mxu0 0.0
    %1687 = vmatpush.msra.mxu0 0.0
    %1688 = vmatpush.msra.mxu0 0.0
    %1689 = vmatpush.msra.mxu0 %v1668
    %1690 = vmatpush.msra.mxu0 %v1665
    %1691 = vmatmul.f32.gmra.mxu0 %v1673
    %v1692 = vpop.f32.mrf.mxu0
    %v1693 = vadd.f32 0.0, %v1692
    %1694 = vdwg.mxu0
    %v1696 = vsel %vm267, %v1629, 0
    %1698 = vmatpush.msra.mxu0 0.0
    %1699 = vmatpush.msra.mxu0 0.0
    %1700 = vmatpush.msra.mxu0 0.0
    %1701 = vmatpush.msra.mxu0 0.0
    %1702 = vmatpush.msra.mxu0 0.0
    %1703 = vmatpush.msra.mxu0 0.0
    %1704 = vmatpush.msra.mxu0 0.0
    %1705 = vmatpush.msra.mxu0 0.0
    %1706 = vmatpush.msra.mxu0 0.0
    %1707 = vmatpush.msra.mxu0 0.0
    %1708 = vmatpush.msra.mxu0 0.0
    %1709 = vmatpush.msra.mxu0 0.0
    %1710 = vmatpush.msra.mxu0 0.0
    %1711 = vmatpush.msra.mxu0 0.0
    %1712 = vmatpush.msra.mxu0 %v1627
    %1713 = vmatpush.msra.mxu0 %v1624
    %1714 = vmatmul.f32.gmra.mxu0 %v1696
    %v1715 = vpop.f32.mrf.mxu0
    %v1716 = vadd.f32 %v1693, %v1715
    %1717 = vdwg.mxu0
    %v1718 = vld [vmem:[%s19] sm:$0x1]
    %v1720 = vperm.slane %v1718, 0
    %v1722 = vadd.f32 %v1716, %v1720
    %v1723 = vmax.f32 %v1722, 0.0
    %v1724 = vld [vmem:[%s20] sm:$0xff]
    %v1725 = vld [vmem:[%s20 + $0x8] sm:$0xff]
    %v1726 = vld [vmem:[%s20 + $0x10] sm:$0xff]
    %v1727 = vld [vmem:[%s20 + $0x18] sm:$0xff]
    %v1728 = vld [vmem:[%s20 + $0x20] sm:$0xff]
    %v1729 = vld [vmem:[%s20 + $0x28] sm:$0xff]
    %v1730 = vld [vmem:[%s20 + $0x30] sm:$0xff]
    %v1731 = vld [vmem:[%s20 + $0x38] sm:$0xff]
    %v1732 = vld [vmem:[#allocation2] sm:$0x1]
    %v1734 = vperm.slane %v1732, 0
    %vm1736 = vcmask 523264
    %v1738 = vsel %vm1736, %v1723, 0
    %1740 = vmatpush.msra.mxu0 0.0
    %1741 = vmatpush.msra.mxu0 0.0
    %1742 = vmatpush.msra.mxu0 0.0
    %1743 = vmatpush.msra.mxu0 0.0
    %1744 = vmatpush.msra.mxu0 0.0
    %1745 = vmatpush.msra.mxu0 0.0
    %1746 = vmatpush.msra.mxu0 0.0
    %1747 = vmatpush.msra.mxu0 0.0
    %1748 = vmatpush.msra.mxu0 %v1731
    %1749 = vmatpush.msra.mxu0 %v1730
    %1750 = vmatpush.msra.mxu0 %v1729
    %1751 = vmatpush.msra.mxu0 %v1728
    %1752 = vmatpush.msra.mxu0 %v1727
    %1753 = vmatpush.msra.mxu0 %v1726
    %1754 = vmatpush.msra.mxu0 %v1725
    %1755 = vmatpush.msra.mxu0 %v1724
    %1756 = vmatmul.f32.gmra.mxu0 %v1738
    %v1757 = vpop.f32.mrf.mxu0
    %v1758 = vadd.f32 %v1734, %v1757
    %1759 = vdwg.mxu0
    %vm1760 = vcmask 7168
    %1761 = vst.msk [vmem:[%s22] sm:$0xff] %vm1760, %v1758
    // Predicated region
    $region102: #{forward.1} parent=1 // pred_check
      _
    $region103: #{forward.1} parent=1 // pred_check_branch
      %1763 = sbr.rel (0) target = $region105
    $region104: #{forward.1} parent=1 // pred_region
      _
    $region105: #{forward.1} parent=1 // pred_fallthru
      _
    // Predicated region
    $region106: #{forward.1} parent=1 // pred_check
      _
    $region107: #{forward.1} parent=1 // pred_check_branch
      %1765 = sbr.rel (0) target = $region109
    $region108: #{forward.1} parent=1 // pred_region
      _
    $region109: #{forward.1} parent=1 // pred_fallthru
      _
    %1766 = vsyncpa [#allocation4], 1
    %1767 = vsyncpa [#allocation6], 1

</llo_original>
